<compile_context>
chip_gen: v7x
topology: tpu7x:2x2x1
jax: 0.10.0
libtpu: 0.0.40
codegen_flags: <defaults>
</compile_context>

<pallas_src>
import functools

import jax
import jax.numpy as jnp
from jax.experimental import pallas as pl
from jax.experimental.pallas import tpu as pltpu

EPS = 1e-5  # PyTorch BatchNorm2d default eps


# ---------------------------------------------------------------------------
# In-kernel helpers (all operate on (C, R) lane-dense tiles).
# ---------------------------------------------------------------------------
def _bn(x, g, b):
    """Training-mode BatchNorm: stats over the lane axis (R = N*H*W)."""
    mean = jnp.mean(x, axis=1, keepdims=True)
    var = jnp.mean((x - mean) ** 2, axis=1, keepdims=True)  # biased variance
    return (x - mean) * jax.lax.rsqrt(var + EPS) * g + b


def _conv1x1(a, w):
    """a: (Ci, R), w: (Co, Ci) -> (Co, R). Tiny contraction -> VPU FMA loop."""
    _, ci = w.shape
    acc = w[:, 0:1] * a[0:1, :]
    for c in range(1, ci):
        acc = acc + w[:, c:c + 1] * a[c:c + 1, :]
    return acc


def _shift_flat(x, d):
    """y[:, r] = x[:, r + d] wherever r + d is in range (wrapped lanes are
    garbage and must be masked by the caller). Lane rotate via concat."""
    if d == 0:
        return x
    r = x.shape[1]
    k = d % r
    return jnp.concatenate([x[:, k:], x[:, :k]], axis=1)


# ---------------------------------------------------------------------------
# Fused kernel.
# ---------------------------------------------------------------------------
def bottleneck_kernel(x_ref, g1_ref, b1_ref, w1_ref, g2_ref, b2_ref, w2_ref,
                      g3_ref, b3_ref, w3_ref, g4_ref, b4_ref, ws_ref, sel_ref,
                      bm_ref, o_ref, *, width, stride, remove_first_relu,
                      add_last_bn, preact, has_ws):
    x = x_ref[...]                                  # (Cin, R), R = N*H*W

    # --- bn1 (+ optional relu) --------------------------------------------
    a1 = _bn(x, g1_ref[...], b1_ref[...])
    if preact:
        a1 = jnp.maximum(a1, 0.0)
        sc_src = a1                                 # shortcut sees relu(bn1(x))
    else:
        if not remove_first_relu:
            a1 = jnp.maximum(a1, 0.0)
        sc_src = x                                  # shortcut sees raw input

    # --- conv1 (1x1) + bn2 + relu -----------------------------------------
    y1 = _conv1x1(a1, w1_ref[...])                  # (Cb, R)
    a2 = jnp.maximum(_bn(y1, g2_ref[...], b2_ref[...]), 0.0)

    # --- conv2 (3x3, pad 1) at unit stride: shift + mask + channel mix -----
    bm = bm_ref[...]                                # (4, R) border masks
    m_top, m_bot = bm[0:1, :], bm[1:2, :]           # h >= 1 , h <= H-2
    m_lft, m_rgt = bm[2:3, :], bm[3:4, :]           # w >= 1 , w <= W-2
    y2 = None
    for dy in range(3):
        for dx in range(3):
            oy, ox = dy - 1, dx - 1
            shifted = _shift_flat(a2, oy * width + ox)
            m = None
            if oy == -1:
                m = m_top
            elif oy == 1:
                m = m_bot
            if ox == -1:
                m = m_lft if m is None else m * m_lft
            elif ox == 1:
                m = m_rgt if m is None else m * m_rgt
            if m is not None:
                shifted = shifted * m
            tap = _conv1x1(shifted, w2_ref[dy * 3 + dx])  # (Cb, R)
            y2 = tap if y2 is None else y2 + tap

    # --- fold in the spatial stride (also downsamples the shortcut input) --
    if stride > 1:
        sel = sel_ref[...]                          # (R, Ro) 0/1 selection
        y2 = jnp.dot(y2, sel, preferred_element_type=jnp.float32)
        sc_src = jnp.dot(sc_src, sel, preferred_element_type=jnp.float32)

    # --- bn3 + relu + conv3 (+ bn4) + shortcut + residual add --------------
    a3 = jnp.maximum(_bn(y2, g3_ref[...], b3_ref[...]), 0.0)
    y3 = _conv1x1(a3, w3_ref[...])                  # (Cout, Ro)
    if add_last_bn:
        y3 = _bn(y3, g4_ref[...], b4_ref[...])
    sc = _conv1x1(sc_src, ws_ref[...]) if has_ws else sc_src
    o_ref[...] = y3 + sc


# ---------------------------------------------------------------------------
# Host wrapper: layout prep + single pallas_call.
# ---------------------------------------------------------------------------
def _full_spec(shape):
    nd = len(shape)
    return pl.BlockSpec(shape, lambda i, nd=nd: (0,) * nd)


@functools.partial(jax.jit, static_argnames=("stride", "remove_first_relu",
                                             "add_last_bn", "preact"))
def bottleneck_block_forward(x_nchw, params, *, stride, remove_first_relu,
                             add_last_bn, preact):
    N, Cin, H, W = x_nchw.shape
    Cb = params["w1_oihw"].shape[0]
    Cout = params["w3_oihw"].shape[0]
    has_ws = params["ws_oihw"] is not None
    if not has_ws:
        assert stride == 1 and Cin == Cout, "identity shortcut needs stride=1, Cin==Cout"

    R = N * H * W
    Ho = (H + 2 - 3) // stride + 1
    Wo = (W + 2 - 3) // stride + 1
    Ro = N * Ho * Wo
    f32 = jnp.float32

    # (C, N*H*W) lane-dense activation layout (single tiny transpose of input).
    xt = jnp.transpose(x_nchw, (1, 0, 2, 3)).reshape(Cin, R).astype(f32)

    # Conv weights as channel-mix matrices.
    w1 = params["w1_oihw"][:, :, 0, 0].astype(f32)                        # (Cb, Cin)
    w2 = jnp.transpose(params["w2_oihw"], (2, 3, 0, 1)).reshape(9, Cb, Cb).astype(f32)
    w3 = params["w3_oihw"][:, :, 0, 0].astype(f32)                        # (Cout, Cb)
    ws = (params["ws_oihw"][:, :, 0, 0].astype(f32) if has_ws
          else jnp.zeros((1, 128), f32))                                  # dummy if unused

    col = lambda p: p.reshape(-1, 1).astype(f32)   # (C,) -> (C, 1)

    # Border-validity masks for the 3x3 taps (constants under jit).
    idx = jnp.arange(R)
    h_of = (idx % (H * W)) // W
    w_of = idx % W
    bmask = jnp.stack([h_of >= 1, h_of <= H - 2,
                       w_of >= 1, w_of <= W - 2]).astype(f32)             # (4, R)

    # 0/1 selection matrix folding the spatial stride into one small matmul.
    if stride > 1:
        r_out = jnp.arange(Ro)
        n_o = r_out // (Ho * Wo)
        rem = r_out % (Ho * Wo)
        tgt = n_o * (H * W) + (rem // Wo) * stride * W + (rem % Wo) * stride
        sel = (idx[:, None] == tgt[None, :]).astype(f32)                  # (R, Ro)
    else:
        sel = jnp.zeros((1, 128), f32)                                    # dummy

    args = (xt, col(params["g1"]), col(params["b1"]), w1,
            col(params["g2"]), col(params["b2"]), w2,
            col(params["g3"]), col(params["b3"]), w3,
            col(params["g4"]), col(params["b4"]), ws, sel, bmask)

    kernel = functools.partial(
        bottleneck_kernel, width=W, stride=stride,
        remove_first_relu=remove_first_relu, add_last_bn=add_last_bn,
        preact=preact, has_ws=has_ws)

    out = pl.pallas_call(
        kernel,
        grid=(1,),
        in_specs=[_full_spec(a.shape) for a in args],
        out_specs=_full_spec((Cout, Ro)),
        out_shape=jax.ShapeDtypeStruct((Cout, Ro), f32),
        compiler_params=pltpu.CompilerParams(dimension_semantics=("arbitrary",)),
    )(*args)

    # (Cout, N*Ho*Wo) -> NCHW.
    return jnp.transpose(out.reshape(Cout, N, Ho, Wo), (1, 0, 2, 3))


# ---------------------------------------------------------------------------
# Plain-JAX reference (independent path via lax.conv) for validation.
# ---------------------------------------------------------------------------
def reference_forward(x, params, *, stride, remove_first_relu, add_last_bn, preact):
    def bn(t, g, b):
        mean = jnp.mean(t, axis=(0, 2, 3), keepdims=True)
        var = jnp.mean((t - mean) ** 2, axis=(0, 2, 3), keepdims=True)
        return ((t - mean) / jnp.sqrt(var + EPS)) * g.reshape(1, -1, 1, 1) + b.reshape(1, -1, 1, 1)

    def conv(t, w, s, p):
        return jax.lax.conv_general_dilated(
            t, w, (s, s), ((p, p), (p, p)),
            dimension_numbers=("NCHW", "OIHW", "NCHW"),
            precision=jax.lax.Precision.HIGHEST)

    relu = lambda t: jnp.maximum(t, 0.0)
    x = x.astype(jnp.float32)
    if preact:
        x = relu(bn(x, params["g1"], params["b1"]))
        y = conv(x, params["w1_oihw"], 1, 0)
    else:
        y = bn(x, params["g1"], params["b1"])
        if not remove_first_relu:
            y = relu(y)
        y = conv(y, params["w1_oihw"], 1, 0)
    y = relu(bn(y, params["g2"], params["b2"]))
    y = conv(y, params["w2_oihw"], stride, 1)
    y = relu(bn(y, params["g3"], params["b3"]))
    y = conv(y, params["w3_oihw"], 1, 0)
    if add_last_bn:
        y = bn(y, params["g4"], params["b4"])
    sc = conv(x, params["ws_oihw"], stride, 0) if params["ws_oihw"] is not None else x
    return y + sc


def init_params(key, in_channels, out_channels):
    Cb = out_channels // 4  # expansion = 4
    ks = jax.random.split(key, 12)
    n = lambda k, s, scale=0.1: (scale * jax.random.normal(k, s)).astype(jnp.float32)
    return dict(
        g1=1.0 + n(ks[0], (in_channels,)), b1=n(ks[1], (in_channels,)),
        w1_oihw=n(ks[2], (Cb, in_channels, 1, 1)),
        g2=1.0 + n(ks[3], (Cb,)), b2=n(ks[4], (Cb,)),
        w2_oihw=n(ks[5], (Cb, Cb, 3, 3)),
        g3=1.0 + n(ks[6], (Cb,)), b3=n(ks[7], (Cb,)),
        w3_oihw=n(ks[8], (out_channels, Cb, 1, 1)),
        g4=1.0 + n(ks[9], (out_channels,)), b4=n(ks[10], (out_channels,)),
        ws_oihw=(n(ks[11], (out_channels, in_channels, 1, 1))
                 if in_channels != out_channels else None),
    )


if __name__ == "__main__":
    key = jax.random.PRNGKey(0)
    kx, kp = jax.random.split(key)

    N, Cin, H, W = 2, 4, 16, 16
    Cout = 16
    x = jax.random.normal(kx, (N, Cin, H, W), dtype=jnp.float32)
    params = init_params(kp, Cin, Cout)

    configs = [
        dict(stride=2, remove_first_relu=False, add_last_bn=True, preact=False),
        dict(stride=1, remove_first_relu=True, add_last_bn=False, preact=True),
    ]
    for cfg in configs:
        out = jax.block_until_ready(bottleneck_block_forward(x, params, **cfg))
        ref = reference_forward(x, params, **cfg)
        assert out.shape == ref.shape, (out.shape, ref.shape)
        err = float(jnp.max(jnp.abs(out - ref)))
        assert jnp.allclose(out, ref, rtol=2e-3, atol=2e-3), err

    print("KERNEL_OK")
</pallas_src>

<mosaic_0001>
module attributes {stable_mosaic.version = 11 : i64} {
  func.func @bottleneck_kernel(%arg0: i32, %arg1: memref<4x512xf32, #tpu.memory_space<vmem>>, %arg2: memref<4x1xf32, #tpu.memory_space<vmem>>, %arg3: memref<4x1xf32, #tpu.memory_space<vmem>>, %arg4: memref<4x4xf32, #tpu.memory_space<vmem>>, %arg5: memref<4x1xf32, #tpu.memory_space<vmem>>, %arg6: memref<4x1xf32, #tpu.memory_space<vmem>>, %arg7: memref<9x4x4xf32, #tpu.memory_space<vmem>>, %arg8: memref<4x1xf32, #tpu.memory_space<vmem>>, %arg9: memref<4x1xf32, #tpu.memory_space<vmem>>, %arg10: memref<16x4xf32, #tpu.memory_space<vmem>>, %arg11: memref<16x1xf32, #tpu.memory_space<vmem>>, %arg12: memref<16x1xf32, #tpu.memory_space<vmem>>, %arg13: memref<16x4xf32, #tpu.memory_space<vmem>>, %arg14: memref<512x128xf32, #tpu.memory_space<vmem>>, %arg15: memref<4x512xf32, #tpu.memory_space<vmem>>, %arg16: memref<16x128xf32, #tpu.memory_space<vmem>>) attributes {dimension_semantics = [#tpu.dimension_semantics<arbitrary>], iteration_bounds = array<i64: 1>, scalar_prefetch = 0 : i64, scratch_operands = 0 : i64, tpu.core_type = #tpu.core_type<tc>, window_params = [{pipeline_mode = #tpu.pipeline_mode<synchronous>, transform_indices = @transform_0, window_bounds = array<i64: 4, 512>}, {pipeline_mode = #tpu.pipeline_mode<synchronous>, transform_indices = @transform_1, window_bounds = array<i64: 4, 1>}, {pipeline_mode = #tpu.pipeline_mode<synchronous>, transform_indices = @transform_2, window_bounds = array<i64: 4, 1>}, {pipeline_mode = #tpu.pipeline_mode<synchronous>, transform_indices = @transform_3, window_bounds = array<i64: 4, 4>}, {pipeline_mode = #tpu.pipeline_mode<synchronous>, transform_indices = @transform_4, window_bounds = array<i64: 4, 1>}, {pipeline_mode = #tpu.pipeline_mode<synchronous>, transform_indices = @transform_5, window_bounds = array<i64: 4, 1>}, {pipeline_mode = #tpu.pipeline_mode<synchronous>, transform_indices = @transform_6, window_bounds = array<i64: 9, 4, 4>}, {pipeline_mode = #tpu.pipeline_mode<synchronous>, transform_indices = @transform_7, window_bounds = array<i64: 4, 1>}, {pipeline_mode = #tpu.pipeline_mode<synchronous>, transform_indices = @transform_8, window_bounds = array<i64: 4, 1>}, {pipeline_mode = #tpu.pipeline_mode<synchronous>, transform_indices = @transform_9, window_bounds = array<i64: 16, 4>}, {pipeline_mode = #tpu.pipeline_mode<synchronous>, transform_indices = @transform_10, window_bounds = array<i64: 16, 1>}, {pipeline_mode = #tpu.pipeline_mode<synchronous>, transform_indices = @transform_11, window_bounds = array<i64: 16, 1>}, {pipeline_mode = #tpu.pipeline_mode<synchronous>, transform_indices = @transform_12, window_bounds = array<i64: 16, 4>}, {pipeline_mode = #tpu.pipeline_mode<synchronous>, transform_indices = @transform_13, window_bounds = array<i64: 512, 128>}, {pipeline_mode = #tpu.pipeline_mode<synchronous>, transform_indices = @transform_14, window_bounds = array<i64: 4, 512>}, {pipeline_mode = #tpu.pipeline_mode<synchronous>, transform_indices = @transform_15, window_bounds = array<i64: 16, 128>}]} {
    %c0 = arith.constant 0 : index
    %c0_0 = arith.constant 0 : index
    %0 = vector.load %arg1[%c0, %c0_0] : memref<4x512xf32, #tpu.memory_space<vmem>>, vector<4x512xf32>
    %c0_1 = arith.constant 0 : index
    %c0_2 = arith.constant 0 : index
    %1 = vector.load %arg2[%c0_1, %c0_2] : memref<4x1xf32, #tpu.memory_space<vmem>>, vector<4x1xf32>
    %c0_3 = arith.constant 0 : index
    %c0_4 = arith.constant 0 : index
    %2 = vector.load %arg3[%c0_3, %c0_4] : memref<4x1xf32, #tpu.memory_space<vmem>>, vector<4x1xf32>
    %cst = arith.constant dense<0.000000e+00> : vector<4xf32>
    %3 = vector.multi_reduction <add>, %0, %cst [1] : vector<4x512xf32> to vector<4xf32>
    %4 = vector.shape_cast %3 : vector<4xf32> to vector<4x1xf32>
    %cst_5 = arith.constant 5.120000e+02 : f32
    %5 = vector.broadcast %cst_5 : f32 to vector<4x1xf32>
    %6 = arith.divf %4, %5 : vector<4x1xf32>
    %7 = vector.broadcast %6 : vector<4x1xf32> to vector<4x512xf32>
    %8 = arith.subf %0, %7 : vector<4x512xf32>
    %9 = arith.mulf %8, %8 : vector<4x512xf32>
    %cst_6 = arith.constant dense<0.000000e+00> : vector<4xf32>
    %10 = vector.multi_reduction <add>, %9, %cst_6 [1] : vector<4x512xf32> to vector<4xf32>
    %11 = vector.shape_cast %10 : vector<4xf32> to vector<4x1xf32>
    %cst_7 = arith.constant 5.120000e+02 : f32
    %12 = vector.broadcast %cst_7 : f32 to vector<4x1xf32>
    %13 = arith.divf %11, %12 : vector<4x1xf32>
    %14 = vector.broadcast %6 : vector<4x1xf32> to vector<4x512xf32>
    %15 = arith.subf %0, %14 : vector<4x512xf32>
    %cst_8 = arith.constant 9.99999974E-6 : f32
    %16 = vector.broadcast %cst_8 : f32 to vector<4x1xf32>
    %17 = arith.addf %13, %16 : vector<4x1xf32>
    %18 = math.rsqrt %17 : vector<4x1xf32>
    %19 = vector.broadcast %18 : vector<4x1xf32> to vector<4x512xf32>
    %20 = arith.mulf %15, %19 : vector<4x512xf32>
    %21 = vector.broadcast %1 : vector<4x1xf32> to vector<4x512xf32>
    %22 = arith.mulf %20, %21 : vector<4x512xf32>
    %23 = vector.broadcast %2 : vector<4x1xf32> to vector<4x512xf32>
    %24 = arith.addf %22, %23 : vector<4x512xf32>
    %cst_9 = arith.constant 0.000000e+00 : f32
    %25 = vector.broadcast %cst_9 : f32 to vector<4x512xf32>
    %26 = arith.maximumf %24, %25 : vector<4x512xf32>
    %c0_10 = arith.constant 0 : index
    %c0_11 = arith.constant 0 : index
    %27 = vector.load %arg4[%c0_10, %c0_11] : memref<4x4xf32, #tpu.memory_space<vmem>>, vector<4x4xf32>
    %28 = vector.extract_strided_slice %27 {offsets = [0, 0], sizes = [4, 1], strides = [1, 1]} : vector<4x4xf32> to vector<4x1xf32>
    %29 = vector.extract_strided_slice %26 {offsets = [0, 0], sizes = [1, 512], strides = [1, 1]} : vector<4x512xf32> to vector<1x512xf32>
    %30 = vector.broadcast %28 : vector<4x1xf32> to vector<4x512xf32>
    %31 = vector.broadcast %29 : vector<1x512xf32> to vector<4x512xf32>
    %32 = arith.mulf %30, %31 : vector<4x512xf32>
    %33 = vector.extract_strided_slice %27 {offsets = [0, 1], sizes = [4, 1], strides = [1, 1]} : vector<4x4xf32> to vector<4x1xf32>
    %34 = vector.extract_strided_slice %26 {offsets = [1, 0], sizes = [1, 512], strides = [1, 1]} : vector<4x512xf32> to vector<1x512xf32>
    %35 = vector.broadcast %33 : vector<4x1xf32> to vector<4x512xf32>
    %36 = vector.broadcast %34 : vector<1x512xf32> to vector<4x512xf32>
    %37 = arith.mulf %35, %36 : vector<4x512xf32>
    %38 = arith.addf %32, %37 : vector<4x512xf32>
    %39 = vector.extract_strided_slice %27 {offsets = [0, 2], sizes = [4, 1], strides = [1, 1]} : vector<4x4xf32> to vector<4x1xf32>
    %40 = vector.extract_strided_slice %26 {offsets = [2, 0], sizes = [1, 512], strides = [1, 1]} : vector<4x512xf32> to vector<1x512xf32>
    %41 = vector.broadcast %39 : vector<4x1xf32> to vector<4x512xf32>
    %42 = vector.broadcast %40 : vector<1x512xf32> to vector<4x512xf32>
    %43 = arith.mulf %41, %42 : vector<4x512xf32>
    %44 = arith.addf %38, %43 : vector<4x512xf32>
    %45 = vector.extract_strided_slice %27 {offsets = [0, 3], sizes = [4, 1], strides = [1, 1]} : vector<4x4xf32> to vector<4x1xf32>
    %46 = vector.extract_strided_slice %26 {offsets = [3, 0], sizes = [1, 512], strides = [1, 1]} : vector<4x512xf32> to vector<1x512xf32>
    %47 = vector.broadcast %45 : vector<4x1xf32> to vector<4x512xf32>
    %48 = vector.broadcast %46 : vector<1x512xf32> to vector<4x512xf32>
    %49 = arith.mulf %47, %48 : vector<4x512xf32>
    %50 = arith.addf %44, %49 : vector<4x512xf32>
    %c0_12 = arith.constant 0 : index
    %c0_13 = arith.constant 0 : index
    %51 = vector.load %arg5[%c0_12, %c0_13] : memref<4x1xf32, #tpu.memory_space<vmem>>, vector<4x1xf32>
    %c0_14 = arith.constant 0 : index
    %c0_15 = arith.constant 0 : index
    %52 = vector.load %arg6[%c0_14, %c0_15] : memref<4x1xf32, #tpu.memory_space<vmem>>, vector<4x1xf32>
    %cst_16 = arith.constant dense<0.000000e+00> : vector<4xf32>
    %53 = vector.multi_reduction <add>, %50, %cst_16 [1] : vector<4x512xf32> to vector<4xf32>
    %54 = vector.shape_cast %53 : vector<4xf32> to vector<4x1xf32>
    %cst_17 = arith.constant 5.120000e+02 : f32
    %55 = vector.broadcast %cst_17 : f32 to vector<4x1xf32>
    %56 = arith.divf %54, %55 : vector<4x1xf32>
    %57 = vector.broadcast %56 : vector<4x1xf32> to vector<4x512xf32>
    %58 = arith.subf %50, %57 : vector<4x512xf32>
    %59 = arith.mulf %58, %58 : vector<4x512xf32>
    %cst_18 = arith.constant dense<0.000000e+00> : vector<4xf32>
    %60 = vector.multi_reduction <add>, %59, %cst_18 [1] : vector<4x512xf32> to vector<4xf32>
    %61 = vector.shape_cast %60 : vector<4xf32> to vector<4x1xf32>
    %cst_19 = arith.constant 5.120000e+02 : f32
    %62 = vector.broadcast %cst_19 : f32 to vector<4x1xf32>
    %63 = arith.divf %61, %62 : vector<4x1xf32>
    %64 = vector.broadcast %56 : vector<4x1xf32> to vector<4x512xf32>
    %65 = arith.subf %50, %64 : vector<4x512xf32>
    %cst_20 = arith.constant 9.99999974E-6 : f32
    %66 = vector.broadcast %cst_20 : f32 to vector<4x1xf32>
    %67 = arith.addf %63, %66 : vector<4x1xf32>
    %68 = math.rsqrt %67 : vector<4x1xf32>
    %69 = vector.broadcast %68 : vector<4x1xf32> to vector<4x512xf32>
    %70 = arith.mulf %65, %69 : vector<4x512xf32>
    %71 = vector.broadcast %51 : vector<4x1xf32> to vector<4x512xf32>
    %72 = arith.mulf %70, %71 : vector<4x512xf32>
    %73 = vector.broadcast %52 : vector<4x1xf32> to vector<4x512xf32>
    %74 = arith.addf %72, %73 : vector<4x512xf32>
    %cst_21 = arith.constant 0.000000e+00 : f32
    %75 = vector.broadcast %cst_21 : f32 to vector<4x512xf32>
    %76 = arith.maximumf %74, %75 : vector<4x512xf32>
    %c0_22 = arith.constant 0 : index
    %c0_23 = arith.constant 0 : index
    %77 = vector.load %arg15[%c0_22, %c0_23] : memref<4x512xf32, #tpu.memory_space<vmem>>, vector<4x512xf32>
    %78 = vector.extract_strided_slice %77 {offsets = [0, 0], sizes = [1, 512], strides = [1, 1]} : vector<4x512xf32> to vector<1x512xf32>
    %79 = vector.extract_strided_slice %77 {offsets = [1, 0], sizes = [1, 512], strides = [1, 1]} : vector<4x512xf32> to vector<1x512xf32>
    %80 = vector.extract_strided_slice %77 {offsets = [2, 0], sizes = [1, 512], strides = [1, 1]} : vector<4x512xf32> to vector<1x512xf32>
    %81 = vector.extract_strided_slice %77 {offsets = [3, 0], sizes = [1, 512], strides = [1, 1]} : vector<4x512xf32> to vector<1x512xf32>
    %82 = vector.extract_strided_slice %76 {offsets = [0, 495], sizes = [4, 17], strides = [1, 1]} : vector<4x512xf32> to vector<4x17xf32>
    %83 = vector.extract_strided_slice %76 {offsets = [0, 0], sizes = [4, 495], strides = [1, 1]} : vector<4x512xf32> to vector<4x495xf32>
    %84 = tpu.concatenate %82, %83 in 1 : vector<4x17xf32>, vector<4x495xf32> -> vector<4x512xf32>
    %85 = arith.mulf %78, %80 : vector<1x512xf32>
    %86 = vector.broadcast %85 : vector<1x512xf32> to vector<4x512xf32>
    %87 = arith.mulf %84, %86 : vector<4x512xf32>
    %c0_24 = arith.constant 0 : index
    %c0_25 = arith.constant 0 : index
    %c0_26 = arith.constant 0 : index
    %88 = vector.load %arg7[%c0_24, %c0_25, %c0_26] : memref<9x4x4xf32, #tpu.memory_space<vmem>>, vector<1x4x4xf32>
    %89 = vector.shape_cast %88 : vector<1x4x4xf32> to vector<4x4xf32>
    %90 = vector.extract_strided_slice %89 {offsets = [0, 0], sizes = [4, 1], strides = [1, 1]} : vector<4x4xf32> to vector<4x1xf32>
    %91 = vector.extract_strided_slice %87 {offsets = [0, 0], sizes = [1, 512], strides = [1, 1]} : vector<4x512xf32> to vector<1x512xf32>
    %92 = vector.broadcast %90 : vector<4x1xf32> to vector<4x512xf32>
    %93 = vector.broadcast %91 : vector<1x512xf32> to vector<4x512xf32>
    %94 = arith.mulf %92, %93 : vector<4x512xf32>
    %95 = vector.extract_strided_slice %89 {offsets = [0, 1], sizes = [4, 1], strides = [1, 1]} : vector<4x4xf32> to vector<4x1xf32>
    %96 = vector.extract_strided_slice %87 {offsets = [1, 0], sizes = [1, 512], strides = [1, 1]} : vector<4x512xf32> to vector<1x512xf32>
    %97 = vector.broadcast %95 : vector<4x1xf32> to vector<4x512xf32>
    %98 = vector.broadcast %96 : vector<1x512xf32> to vector<4x512xf32>
    %99 = arith.mulf %97, %98 : vector<4x512xf32>
    %100 = arith.addf %94, %99 : vector<4x512xf32>
    %101 = vector.extract_strided_slice %89 {offsets = [0, 2], sizes = [4, 1], strides = [1, 1]} : vector<4x4xf32> to vector<4x1xf32>
    %102 = vector.extract_strided_slice %87 {offsets = [2, 0], sizes = [1, 512], strides = [1, 1]} : vector<4x512xf32> to vector<1x512xf32>
    %103 = vector.broadcast %101 : vector<4x1xf32> to vector<4x512xf32>
    %104 = vector.broadcast %102 : vector<1x512xf32> to vector<4x512xf32>
    %105 = arith.mulf %103, %104 : vector<4x512xf32>
    %106 = arith.addf %100, %105 : vector<4x512xf32>
    %107 = vector.extract_strided_slice %89 {offsets = [0, 3], sizes = [4, 1], strides = [1, 1]} : vector<4x4xf32> to vector<4x1xf32>
    %108 = vector.extract_strided_slice %87 {offsets = [3, 0], sizes = [1, 512], strides = [1, 1]} : vector<4x512xf32> to vector<1x512xf32>
    %109 = vector.broadcast %107 : vector<4x1xf32> to vector<4x512xf32>
    %110 = vector.broadcast %108 : vector<1x512xf32> to vector<4x512xf32>
    %111 = arith.mulf %109, %110 : vector<4x512xf32>
    %112 = arith.addf %106, %111 : vector<4x512xf32>
    %113 = vector.extract_strided_slice %76 {offsets = [0, 496], sizes = [4, 16], strides = [1, 1]} : vector<4x512xf32> to vector<4x16xf32>
    %114 = vector.extract_strided_slice %76 {offsets = [0, 0], sizes = [4, 496], strides = [1, 1]} : vector<4x512xf32> to vector<4x496xf32>
    %115 = tpu.concatenate %113, %114 in 1 : vector<4x16xf32>, vector<4x496xf32> -> vector<4x512xf32>
    %116 = vector.broadcast %78 : vector<1x512xf32> to vector<4x512xf32>
    %117 = arith.mulf %115, %116 : vector<4x512xf32>
    %c1 = arith.constant 1 : index
    %c0_27 = arith.constant 0 : index
    %c0_28 = arith.constant 0 : index
    %118 = vector.load %arg7[%c1, %c0_27, %c0_28] : memref<9x4x4xf32, #tpu.memory_space<vmem>>, vector<1x4x4xf32>
    %119 = vector.shape_cast %118 : vector<1x4x4xf32> to vector<4x4xf32>
    %120 = vector.extract_strided_slice %119 {offsets = [0, 0], sizes = [4, 1], strides = [1, 1]} : vector<4x4xf32> to vector<4x1xf32>
    %121 = vector.extract_strided_slice %117 {offsets = [0, 0], sizes = [1, 512], strides = [1, 1]} : vector<4x512xf32> to vector<1x512xf32>
    %122 = vector.broadcast %120 : vector<4x1xf32> to vector<4x512xf32>
    %123 = vector.broadcast %121 : vector<1x512xf32> to vector<4x512xf32>
    %124 = arith.mulf %122, %123 : vector<4x512xf32>
    %125 = vector.extract_strided_slice %119 {offsets = [0, 1], sizes = [4, 1], strides = [1, 1]} : vector<4x4xf32> to vector<4x1xf32>
    %126 = vector.extract_strided_slice %117 {offsets = [1, 0], sizes = [1, 512], strides = [1, 1]} : vector<4x512xf32> to vector<1x512xf32>
    %127 = vector.broadcast %125 : vector<4x1xf32> to vector<4x512xf32>
    %128 = vector.broadcast %126 : vector<1x512xf32> to vector<4x512xf32>
    %129 = arith.mulf %127, %128 : vector<4x512xf32>
    %130 = arith.addf %124, %129 : vector<4x512xf32>
    %131 = vector.extract_strided_slice %119 {offsets = [0, 2], sizes = [4, 1], strides = [1, 1]} : vector<4x4xf32> to vector<4x1xf32>
    %132 = vector.extract_strided_slice %117 {offsets = [2, 0], sizes = [1, 512], strides = [1, 1]} : vector<4x512xf32> to vector<1x512xf32>
    %133 = vector.broadcast %131 : vector<4x1xf32> to vector<4x512xf32>
    %134 = vector.broadcast %132 : vector<1x512xf32> to vector<4x512xf32>
    %135 = arith.mulf %133, %134 : vector<4x512xf32>
    %136 = arith.addf %130, %135 : vector<4x512xf32>
    %137 = vector.extract_strided_slice %119 {offsets = [0, 3], sizes = [4, 1], strides = [1, 1]} : vector<4x4xf32> to vector<4x1xf32>
    %138 = vector.extract_strided_slice %117 {offsets = [3, 0], sizes = [1, 512], strides = [1, 1]} : vector<4x512xf32> to vector<1x512xf32>
    %139 = vector.broadcast %137 : vector<4x1xf32> to vector<4x512xf32>
    %140 = vector.broadcast %138 : vector<1x512xf32> to vector<4x512xf32>
    %141 = arith.mulf %139, %140 : vector<4x512xf32>
    %142 = arith.addf %136, %141 : vector<4x512xf32>
    %143 = arith.addf %112, %142 : vector<4x512xf32>
    %144 = vector.extract_strided_slice %76 {offsets = [0, 497], sizes = [4, 15], strides = [1, 1]} : vector<4x512xf32> to vector<4x15xf32>
    %145 = vector.extract_strided_slice %76 {offsets = [0, 0], sizes = [4, 497], strides = [1, 1]} : vector<4x512xf32> to vector<4x497xf32>
    %146 = tpu.concatenate %144, %145 in 1 : vector<4x15xf32>, vector<4x497xf32> -> vector<4x512xf32>
    %147 = arith.mulf %78, %81 : vector<1x512xf32>
    %148 = vector.broadcast %147 : vector<1x512xf32> to vector<4x512xf32>
    %149 = arith.mulf %146, %148 : vector<4x512xf32>
    %c2 = arith.constant 2 : index
    %c0_29 = arith.constant 0 : index
    %c0_30 = arith.constant 0 : index
    %150 = vector.load %arg7[%c2, %c0_29, %c0_30] : memref<9x4x4xf32, #tpu.memory_space<vmem>>, vector<1x4x4xf32>
    %151 = vector.shape_cast %150 : vector<1x4x4xf32> to vector<4x4xf32>
    %152 = vector.extract_strided_slice %151 {offsets = [0, 0], sizes = [4, 1], strides = [1, 1]} : vector<4x4xf32> to vector<4x1xf32>
    %153 = vector.extract_strided_slice %149 {offsets = [0, 0], sizes = [1, 512], strides = [1, 1]} : vector<4x512xf32> to vector<1x512xf32>
    %154 = vector.broadcast %152 : vector<4x1xf32> to vector<4x512xf32>
    %155 = vector.broadcast %153 : vector<1x512xf32> to vector<4x512xf32>
    %156 = arith.mulf %154, %155 : vector<4x512xf32>
    %157 = vector.extract_strided_slice %151 {offsets = [0, 1], sizes = [4, 1], strides = [1, 1]} : vector<4x4xf32> to vector<4x1xf32>
    %158 = vector.extract_strided_slice %149 {offsets = [1, 0], sizes = [1, 512], strides = [1, 1]} : vector<4x512xf32> to vector<1x512xf32>
    %159 = vector.broadcast %157 : vector<4x1xf32> to vector<4x512xf32>
    %160 = vector.broadcast %158 : vector<1x512xf32> to vector<4x512xf32>
    %161 = arith.mulf %159, %160 : vector<4x512xf32>
    %162 = arith.addf %156, %161 : vector<4x512xf32>
    %163 = vector.extract_strided_slice %151 {offsets = [0, 2], sizes = [4, 1], strides = [1, 1]} : vector<4x4xf32> to vector<4x1xf32>
    %164 = vector.extract_strided_slice %149 {offsets = [2, 0], sizes = [1, 512], strides = [1, 1]} : vector<4x512xf32> to vector<1x512xf32>
    %165 = vector.broadcast %163 : vector<4x1xf32> to vector<4x512xf32>
    %166 = vector.broadcast %164 : vector<1x512xf32> to vector<4x512xf32>
    %167 = arith.mulf %165, %166 : vector<4x512xf32>
    %168 = arith.addf %162, %167 : vector<4x512xf32>
    %169 = vector.extract_strided_slice %151 {offsets = [0, 3], sizes = [4, 1], strides = [1, 1]} : vector<4x4xf32> to vector<4x1xf32>
    %170 = vector.extract_strided_slice %149 {offsets = [3, 0], sizes = [1, 512], strides = [1, 1]} : vector<4x512xf32> to vector<1x512xf32>
    %171 = vector.broadcast %169 : vector<4x1xf32> to vector<4x512xf32>
    %172 = vector.broadcast %170 : vector<1x512xf32> to vector<4x512xf32>
    %173 = arith.mulf %171, %172 : vector<4x512xf32>
    %174 = arith.addf %168, %173 : vector<4x512xf32>
    %175 = arith.addf %143, %174 : vector<4x512xf32>
    %176 = vector.extract_strided_slice %76 {offsets = [0, 511], sizes = [4, 1], strides = [1, 1]} : vector<4x512xf32> to vector<4x1xf32>
    %177 = vector.extract_strided_slice %76 {offsets = [0, 0], sizes = [4, 511], strides = [1, 1]} : vector<4x512xf32> to vector<4x511xf32>
    %178 = tpu.concatenate %176, %177 in 1 : vector<4x1xf32>, vector<4x511xf32> -> vector<4x512xf32>
    %179 = vector.broadcast %80 : vector<1x512xf32> to vector<4x512xf32>
    %180 = arith.mulf %178, %179 : vector<4x512xf32>
    %c3 = arith.constant 3 : index
    %c0_31 = arith.constant 0 : index
    %c0_32 = arith.constant 0 : index
    %181 = vector.load %arg7[%c3, %c0_31, %c0_32] : memref<9x4x4xf32, #tpu.memory_space<vmem>>, vector<1x4x4xf32>
    %182 = vector.shape_cast %181 : vector<1x4x4xf32> to vector<4x4xf32>
    %183 = vector.extract_strided_slice %182 {offsets = [0, 0], sizes = [4, 1], strides = [1, 1]} : vector<4x4xf32> to vector<4x1xf32>
    %184 = vector.extract_strided_slice %180 {offsets = [0, 0], sizes = [1, 512], strides = [1, 1]} : vector<4x512xf32> to vector<1x512xf32>
    %185 = vector.broadcast %183 : vector<4x1xf32> to vector<4x512xf32>
    %186 = vector.broadcast %184 : vector<1x512xf32> to vector<4x512xf32>
    %187 = arith.mulf %185, %186 : vector<4x512xf32>
    %188 = vector.extract_strided_slice %182 {offsets = [0, 1], sizes = [4, 1], strides = [1, 1]} : vector<4x4xf32> to vector<4x1xf32>
    %189 = vector.extract_strided_slice %180 {offsets = [1, 0], sizes = [1, 512], strides = [1, 1]} : vector<4x512xf32> to vector<1x512xf32>
    %190 = vector.broadcast %188 : vector<4x1xf32> to vector<4x512xf32>
    %191 = vector.broadcast %189 : vector<1x512xf32> to vector<4x512xf32>
    %192 = arith.mulf %190, %191 : vector<4x512xf32>
    %193 = arith.addf %187, %192 : vector<4x512xf32>
    %194 = vector.extract_strided_slice %182 {offsets = [0, 2], sizes = [4, 1], strides = [1, 1]} : vector<4x4xf32> to vector<4x1xf32>
    %195 = vector.extract_strided_slice %180 {offsets = [2, 0], sizes = [1, 512], strides = [1, 1]} : vector<4x512xf32> to vector<1x512xf32>
    %196 = vector.broadcast %194 : vector<4x1xf32> to vector<4x512xf32>
    %197 = vector.broadcast %195 : vector<1x512xf32> to vector<4x512xf32>
    %198 = arith.mulf %196, %197 : vector<4x512xf32>
    %199 = arith.addf %193, %198 : vector<4x512xf32>
    %200 = vector.extract_strided_slice %182 {offsets = [0, 3], sizes = [4, 1], strides = [1, 1]} : vector<4x4xf32> to vector<4x1xf32>
    %201 = vector.extract_strided_slice %180 {offsets = [3, 0], sizes = [1, 512], strides = [1, 1]} : vector<4x512xf32> to vector<1x512xf32>
    %202 = vector.broadcast %200 : vector<4x1xf32> to vector<4x512xf32>
    %203 = vector.broadcast %201 : vector<1x512xf32> to vector<4x512xf32>
    %204 = arith.mulf %202, %203 : vector<4x512xf32>
    %205 = arith.addf %199, %204 : vector<4x512xf32>
    %206 = arith.addf %175, %205 : vector<4x512xf32>
    %c4 = arith.constant 4 : index
    %c0_33 = arith.constant 0 : index
    %c0_34 = arith.constant 0 : index
    %207 = vector.load %arg7[%c4, %c0_33, %c0_34] : memref<9x4x4xf32, #tpu.memory_space<vmem>>, vector<1x4x4xf32>
    %208 = vector.shape_cast %207 : vector<1x4x4xf32> to vector<4x4xf32>
    %209 = vector.extract_strided_slice %208 {offsets = [0, 0], sizes = [4, 1], strides = [1, 1]} : vector<4x4xf32> to vector<4x1xf32>
    %210 = vector.extract_strided_slice %76 {offsets = [0, 0], sizes = [1, 512], strides = [1, 1]} : vector<4x512xf32> to vector<1x512xf32>
    %211 = vector.broadcast %209 : vector<4x1xf32> to vector<4x512xf32>
    %212 = vector.broadcast %210 : vector<1x512xf32> to vector<4x512xf32>
    %213 = arith.mulf %211, %212 : vector<4x512xf32>
    %214 = vector.extract_strided_slice %208 {offsets = [0, 1], sizes = [4, 1], strides = [1, 1]} : vector<4x4xf32> to vector<4x1xf32>
    %215 = vector.extract_strided_slice %76 {offsets = [1, 0], sizes = [1, 512], strides = [1, 1]} : vector<4x512xf32> to vector<1x512xf32>
    %216 = vector.broadcast %214 : vector<4x1xf32> to vector<4x512xf32>
    %217 = vector.broadcast %215 : vector<1x512xf32> to vector<4x512xf32>
    %218 = arith.mulf %216, %217 : vector<4x512xf32>
    %219 = arith.addf %213, %218 : vector<4x512xf32>
    %220 = vector.extract_strided_slice %208 {offsets = [0, 2], sizes = [4, 1], strides = [1, 1]} : vector<4x4xf32> to vector<4x1xf32>
    %221 = vector.extract_strided_slice %76 {offsets = [2, 0], sizes = [1, 512], strides = [1, 1]} : vector<4x512xf32> to vector<1x512xf32>
    %222 = vector.broadcast %220 : vector<4x1xf32> to vector<4x512xf32>
    %223 = vector.broadcast %221 : vector<1x512xf32> to vector<4x512xf32>
    %224 = arith.mulf %222, %223 : vector<4x512xf32>
    %225 = arith.addf %219, %224 : vector<4x512xf32>
    %226 = vector.extract_strided_slice %208 {offsets = [0, 3], sizes = [4, 1], strides = [1, 1]} : vector<4x4xf32> to vector<4x1xf32>
    %227 = vector.extract_strided_slice %76 {offsets = [3, 0], sizes = [1, 512], strides = [1, 1]} : vector<4x512xf32> to vector<1x512xf32>
    %228 = vector.broadcast %226 : vector<4x1xf32> to vector<4x512xf32>
    %229 = vector.broadcast %227 : vector<1x512xf32> to vector<4x512xf32>
    %230 = arith.mulf %228, %229 : vector<4x512xf32>
    %231 = arith.addf %225, %230 : vector<4x512xf32>
    %232 = arith.addf %206, %231 : vector<4x512xf32>
    %233 = vector.extract_strided_slice %76 {offsets = [0, 1], sizes = [4, 511], strides = [1, 1]} : vector<4x512xf32> to vector<4x511xf32>
    %234 = vector.extract_strided_slice %76 {offsets = [0, 0], sizes = [4, 1], strides = [1, 1]} : vector<4x512xf32> to vector<4x1xf32>
    %235 = tpu.concatenate %233, %234 in 1 : vector<4x511xf32>, vector<4x1xf32> -> vector<4x512xf32>
    %236 = vector.broadcast %81 : vector<1x512xf32> to vector<4x512xf32>
    %237 = arith.mulf %235, %236 : vector<4x512xf32>
    %c5 = arith.constant 5 : index
    %c0_35 = arith.constant 0 : index
    %c0_36 = arith.constant 0 : index
    %238 = vector.load %arg7[%c5, %c0_35, %c0_36] : memref<9x4x4xf32, #tpu.memory_space<vmem>>, vector<1x4x4xf32>
    %239 = vector.shape_cast %238 : vector<1x4x4xf32> to vector<4x4xf32>
    %240 = vector.extract_strided_slice %239 {offsets = [0, 0], sizes = [4, 1], strides = [1, 1]} : vector<4x4xf32> to vector<4x1xf32>
    %241 = vector.extract_strided_slice %237 {offsets = [0, 0], sizes = [1, 512], strides = [1, 1]} : vector<4x512xf32> to vector<1x512xf32>
    %242 = vector.broadcast %240 : vector<4x1xf32> to vector<4x512xf32>
    %243 = vector.broadcast %241 : vector<1x512xf32> to vector<4x512xf32>
    %244 = arith.mulf %242, %243 : vector<4x512xf32>
    %245 = vector.extract_strided_slice %239 {offsets = [0, 1], sizes = [4, 1], strides = [1, 1]} : vector<4x4xf32> to vector<4x1xf32>
    %246 = vector.extract_strided_slice %237 {offsets = [1, 0], sizes = [1, 512], strides = [1, 1]} : vector<4x512xf32> to vector<1x512xf32>
    %247 = vector.broadcast %245 : vector<4x1xf32> to vector<4x512xf32>
    %248 = vector.broadcast %246 : vector<1x512xf32> to vector<4x512xf32>
    %249 = arith.mulf %247, %248 : vector<4x512xf32>
    %250 = arith.addf %244, %249 : vector<4x512xf32>
    %251 = vector.extract_strided_slice %239 {offsets = [0, 2], sizes = [4, 1], strides = [1, 1]} : vector<4x4xf32> to vector<4x1xf32>
    %252 = vector.extract_strided_slice %237 {offsets = [2, 0], sizes = [1, 512], strides = [1, 1]} : vector<4x512xf32> to vector<1x512xf32>
    %253 = vector.broadcast %251 : vector<4x1xf32> to vector<4x512xf32>
    %254 = vector.broadcast %252 : vector<1x512xf32> to vector<4x512xf32>
    %255 = arith.mulf %253, %254 : vector<4x512xf32>
    %256 = arith.addf %250, %255 : vector<4x512xf32>
    %257 = vector.extract_strided_slice %239 {offsets = [0, 3], sizes = [4, 1], strides = [1, 1]} : vector<4x4xf32> to vector<4x1xf32>
    %258 = vector.extract_strided_slice %237 {offsets = [3, 0], sizes = [1, 512], strides = [1, 1]} : vector<4x512xf32> to vector<1x512xf32>
    %259 = vector.broadcast %257 : vector<4x1xf32> to vector<4x512xf32>
    %260 = vector.broadcast %258 : vector<1x512xf32> to vector<4x512xf32>
    %261 = arith.mulf %259, %260 : vector<4x512xf32>
    %262 = arith.addf %256, %261 : vector<4x512xf32>
    %263 = arith.addf %232, %262 : vector<4x512xf32>
    %264 = vector.extract_strided_slice %76 {offsets = [0, 15], sizes = [4, 497], strides = [1, 1]} : vector<4x512xf32> to vector<4x497xf32>
    %265 = vector.extract_strided_slice %76 {offsets = [0, 0], sizes = [4, 15], strides = [1, 1]} : vector<4x512xf32> to vector<4x15xf32>
    %266 = tpu.concatenate %264, %265 in 1 : vector<4x497xf32>, vector<4x15xf32> -> vector<4x512xf32>
    %267 = arith.mulf %79, %80 : vector<1x512xf32>
    %268 = vector.broadcast %267 : vector<1x512xf32> to vector<4x512xf32>
    %269 = arith.mulf %266, %268 : vector<4x512xf32>
    %c6 = arith.constant 6 : index
    %c0_37 = arith.constant 0 : index
    %c0_38 = arith.constant 0 : index
    %270 = vector.load %arg7[%c6, %c0_37, %c0_38] : memref<9x4x4xf32, #tpu.memory_space<vmem>>, vector<1x4x4xf32>
    %271 = vector.shape_cast %270 : vector<1x4x4xf32> to vector<4x4xf32>
    %272 = vector.extract_strided_slice %271 {offsets = [0, 0], sizes = [4, 1], strides = [1, 1]} : vector<4x4xf32> to vector<4x1xf32>
    %273 = vector.extract_strided_slice %269 {offsets = [0, 0], sizes = [1, 512], strides = [1, 1]} : vector<4x512xf32> to vector<1x512xf32>
    %274 = vector.broadcast %272 : vector<4x1xf32> to vector<4x512xf32>
    %275 = vector.broadcast %273 : vector<1x512xf32> to vector<4x512xf32>
    %276 = arith.mulf %274, %275 : vector<4x512xf32>
    %277 = vector.extract_strided_slice %271 {offsets = [0, 1], sizes = [4, 1], strides = [1, 1]} : vector<4x4xf32> to vector<4x1xf32>
    %278 = vector.extract_strided_slice %269 {offsets = [1, 0], sizes = [1, 512], strides = [1, 1]} : vector<4x512xf32> to vector<1x512xf32>
    %279 = vector.broadcast %277 : vector<4x1xf32> to vector<4x512xf32>
    %280 = vector.broadcast %278 : vector<1x512xf32> to vector<4x512xf32>
    %281 = arith.mulf %279, %280 : vector<4x512xf32>
    %282 = arith.addf %276, %281 : vector<4x512xf32>
    %283 = vector.extract_strided_slice %271 {offsets = [0, 2], sizes = [4, 1], strides = [1, 1]} : vector<4x4xf32> to vector<4x1xf32>
    %284 = vector.extract_strided_slice %269 {offsets = [2, 0], sizes = [1, 512], strides = [1, 1]} : vector<4x512xf32> to vector<1x512xf32>
    %285 = vector.broadcast %283 : vector<4x1xf32> to vector<4x512xf32>
    %286 = vector.broadcast %284 : vector<1x512xf32> to vector<4x512xf32>
    %287 = arith.mulf %285, %286 : vector<4x512xf32>
    %288 = arith.addf %282, %287 : vector<4x512xf32>
    %289 = vector.extract_strided_slice %271 {offsets = [0, 3], sizes = [4, 1], strides = [1, 1]} : vector<4x4xf32> to vector<4x1xf32>
    %290 = vector.extract_strided_slice %269 {offsets = [3, 0], sizes = [1, 512], strides = [1, 1]} : vector<4x512xf32> to vector<1x512xf32>
    %291 = vector.broadcast %289 : vector<4x1xf32> to vector<4x512xf32>
    %292 = vector.broadcast %290 : vector<1x512xf32> to vector<4x512xf32>
    %293 = arith.mulf %291, %292 : vector<4x512xf32>
    %294 = arith.addf %288, %293 : vector<4x512xf32>
    %295 = arith.addf %263, %294 : vector<4x512xf32>
    %296 = vector.extract_strided_slice %76 {offsets = [0, 16], sizes = [4, 496], strides = [1, 1]} : vector<4x512xf32> to vector<4x496xf32>
    %297 = vector.extract_strided_slice %76 {offsets = [0, 0], sizes = [4, 16], strides = [1, 1]} : vector<4x512xf32> to vector<4x16xf32>
    %298 = tpu.concatenate %296, %297 in 1 : vector<4x496xf32>, vector<4x16xf32> -> vector<4x512xf32>
    %299 = vector.broadcast %79 : vector<1x512xf32> to vector<4x512xf32>
    %300 = arith.mulf %298, %299 : vector<4x512xf32>
    %c7 = arith.constant 7 : index
    %c0_39 = arith.constant 0 : index
    %c0_40 = arith.constant 0 : index
    %301 = vector.load %arg7[%c7, %c0_39, %c0_40] : memref<9x4x4xf32, #tpu.memory_space<vmem>>, vector<1x4x4xf32>
    %302 = vector.shape_cast %301 : vector<1x4x4xf32> to vector<4x4xf32>
    %303 = vector.extract_strided_slice %302 {offsets = [0, 0], sizes = [4, 1], strides = [1, 1]} : vector<4x4xf32> to vector<4x1xf32>
    %304 = vector.extract_strided_slice %300 {offsets = [0, 0], sizes = [1, 512], strides = [1, 1]} : vector<4x512xf32> to vector<1x512xf32>
    %305 = vector.broadcast %303 : vector<4x1xf32> to vector<4x512xf32>
    %306 = vector.broadcast %304 : vector<1x512xf32> to vector<4x512xf32>
    %307 = arith.mulf %305, %306 : vector<4x512xf32>
    %308 = vector.extract_strided_slice %302 {offsets = [0, 1], sizes = [4, 1], strides = [1, 1]} : vector<4x4xf32> to vector<4x1xf32>
    %309 = vector.extract_strided_slice %300 {offsets = [1, 0], sizes = [1, 512], strides = [1, 1]} : vector<4x512xf32> to vector<1x512xf32>
    %310 = vector.broadcast %308 : vector<4x1xf32> to vector<4x512xf32>
    %311 = vector.broadcast %309 : vector<1x512xf32> to vector<4x512xf32>
    %312 = arith.mulf %310, %311 : vector<4x512xf32>
    %313 = arith.addf %307, %312 : vector<4x512xf32>
    %314 = vector.extract_strided_slice %302 {offsets = [0, 2], sizes = [4, 1], strides = [1, 1]} : vector<4x4xf32> to vector<4x1xf32>
    %315 = vector.extract_strided_slice %300 {offsets = [2, 0], sizes = [1, 512], strides = [1, 1]} : vector<4x512xf32> to vector<1x512xf32>
    %316 = vector.broadcast %314 : vector<4x1xf32> to vector<4x512xf32>
    %317 = vector.broadcast %315 : vector<1x512xf32> to vector<4x512xf32>
    %318 = arith.mulf %316, %317 : vector<4x512xf32>
    %319 = arith.addf %313, %318 : vector<4x512xf32>
    %320 = vector.extract_strided_slice %302 {offsets = [0, 3], sizes = [4, 1], strides = [1, 1]} : vector<4x4xf32> to vector<4x1xf32>
    %321 = vector.extract_strided_slice %300 {offsets = [3, 0], sizes = [1, 512], strides = [1, 1]} : vector<4x512xf32> to vector<1x512xf32>
    %322 = vector.broadcast %320 : vector<4x1xf32> to vector<4x512xf32>
    %323 = vector.broadcast %321 : vector<1x512xf32> to vector<4x512xf32>
    %324 = arith.mulf %322, %323 : vector<4x512xf32>
    %325 = arith.addf %319, %324 : vector<4x512xf32>
    %326 = arith.addf %295, %325 : vector<4x512xf32>
    %327 = vector.extract_strided_slice %76 {offsets = [0, 17], sizes = [4, 495], strides = [1, 1]} : vector<4x512xf32> to vector<4x495xf32>
    %328 = vector.extract_strided_slice %76 {offsets = [0, 0], sizes = [4, 17], strides = [1, 1]} : vector<4x512xf32> to vector<4x17xf32>
    %329 = tpu.concatenate %327, %328 in 1 : vector<4x495xf32>, vector<4x17xf32> -> vector<4x512xf32>
    %330 = arith.mulf %79, %81 : vector<1x512xf32>
    %331 = vector.broadcast %330 : vector<1x512xf32> to vector<4x512xf32>
    %332 = arith.mulf %329, %331 : vector<4x512xf32>
    %c8 = arith.constant 8 : index
    %c0_41 = arith.constant 0 : index
    %c0_42 = arith.constant 0 : index
    %333 = vector.load %arg7[%c8, %c0_41, %c0_42] : memref<9x4x4xf32, #tpu.memory_space<vmem>>, vector<1x4x4xf32>
    %334 = vector.shape_cast %333 : vector<1x4x4xf32> to vector<4x4xf32>
    %335 = vector.extract_strided_slice %334 {offsets = [0, 0], sizes = [4, 1], strides = [1, 1]} : vector<4x4xf32> to vector<4x1xf32>
    %336 = vector.extract_strided_slice %332 {offsets = [0, 0], sizes = [1, 512], strides = [1, 1]} : vector<4x512xf32> to vector<1x512xf32>
    %337 = vector.broadcast %335 : vector<4x1xf32> to vector<4x512xf32>
    %338 = vector.broadcast %336 : vector<1x512xf32> to vector<4x512xf32>
    %339 = arith.mulf %337, %338 : vector<4x512xf32>
    %340 = vector.extract_strided_slice %334 {offsets = [0, 1], sizes = [4, 1], strides = [1, 1]} : vector<4x4xf32> to vector<4x1xf32>
    %341 = vector.extract_strided_slice %332 {offsets = [1, 0], sizes = [1, 512], strides = [1, 1]} : vector<4x512xf32> to vector<1x512xf32>
    %342 = vector.broadcast %340 : vector<4x1xf32> to vector<4x512xf32>
    %343 = vector.broadcast %341 : vector<1x512xf32> to vector<4x512xf32>
    %344 = arith.mulf %342, %343 : vector<4x512xf32>
    %345 = arith.addf %339, %344 : vector<4x512xf32>
    %346 = vector.extract_strided_slice %334 {offsets = [0, 2], sizes = [4, 1], strides = [1, 1]} : vector<4x4xf32> to vector<4x1xf32>
    %347 = vector.extract_strided_slice %332 {offsets = [2, 0], sizes = [1, 512], strides = [1, 1]} : vector<4x512xf32> to vector<1x512xf32>
    %348 = vector.broadcast %346 : vector<4x1xf32> to vector<4x512xf32>
    %349 = vector.broadcast %347 : vector<1x512xf32> to vector<4x512xf32>
    %350 = arith.mulf %348, %349 : vector<4x512xf32>
    %351 = arith.addf %345, %350 : vector<4x512xf32>
    %352 = vector.extract_strided_slice %334 {offsets = [0, 3], sizes = [4, 1], strides = [1, 1]} : vector<4x4xf32> to vector<4x1xf32>
    %353 = vector.extract_strided_slice %332 {offsets = [3, 0], sizes = [1, 512], strides = [1, 1]} : vector<4x512xf32> to vector<1x512xf32>
    %354 = vector.broadcast %352 : vector<4x1xf32> to vector<4x512xf32>
    %355 = vector.broadcast %353 : vector<1x512xf32> to vector<4x512xf32>
    %356 = arith.mulf %354, %355 : vector<4x512xf32>
    %357 = arith.addf %351, %356 : vector<4x512xf32>
    %358 = arith.addf %326, %357 : vector<4x512xf32>
    %c0_43 = arith.constant 0 : index
    %c0_44 = arith.constant 0 : index
    %359 = vector.load %arg14[%c0_43, %c0_44] : memref<512x128xf32, #tpu.memory_space<vmem>>, vector<512x128xf32>
    %cst_45 = arith.constant dense<0.000000e+00> : vector<4x128xf32>
    %360 = tpu.matmul %358, %359, %cst_45 {dimension_numbers = #tpu.dot_dimension_numbers<[1], [0], [0], [1], [0, 0, 1, 1], [], []>} : vector<4x512xf32>, vector<512x128xf32>, vector<4x128xf32> -> vector<4x128xf32>
    %cst_46 = arith.constant dense<0.000000e+00> : vector<4x128xf32>
    %361 = tpu.matmul %0, %359, %cst_46 {dimension_numbers = #tpu.dot_dimension_numbers<[1], [0], [0], [1], [0, 0, 1, 1], [], []>} : vector<4x512xf32>, vector<512x128xf32>, vector<4x128xf32> -> vector<4x128xf32>
    %c0_47 = arith.constant 0 : index
    %c0_48 = arith.constant 0 : index
    %362 = vector.load %arg8[%c0_47, %c0_48] : memref<4x1xf32, #tpu.memory_space<vmem>>, vector<4x1xf32>
    %c0_49 = arith.constant 0 : index
    %c0_50 = arith.constant 0 : index
    %363 = vector.load %arg9[%c0_49, %c0_50] : memref<4x1xf32, #tpu.memory_space<vmem>>, vector<4x1xf32>
    %cst_51 = arith.constant dense<0.000000e+00> : vector<4xf32>
    %364 = vector.multi_reduction <add>, %360, %cst_51 [1] : vector<4x128xf32> to vector<4xf32>
    %365 = vector.shape_cast %364 : vector<4xf32> to vector<4x1xf32>
    %cst_52 = arith.constant 1.280000e+02 : f32
    %366 = vector.broadcast %cst_52 : f32 to vector<4x1xf32>
    %367 = arith.divf %365, %366 : vector<4x1xf32>
    %368 = vector.broadcast %367 : vector<4x1xf32> to vector<4x128xf32>
    %369 = arith.subf %360, %368 : vector<4x128xf32>
    %370 = arith.mulf %369, %369 : vector<4x128xf32>
    %cst_53 = arith.constant dense<0.000000e+00> : vector<4xf32>
    %371 = vector.multi_reduction <add>, %370, %cst_53 [1] : vector<4x128xf32> to vector<4xf32>
    %372 = vector.shape_cast %371 : vector<4xf32> to vector<4x1xf32>
    %cst_54 = arith.constant 1.280000e+02 : f32
    %373 = vector.broadcast %cst_54 : f32 to vector<4x1xf32>
    %374 = arith.divf %372, %373 : vector<4x1xf32>
    %375 = vector.broadcast %367 : vector<4x1xf32> to vector<4x128xf32>
    %376 = arith.subf %360, %375 : vector<4x128xf32>
    %cst_55 = arith.constant 9.99999974E-6 : f32
    %377 = vector.broadcast %cst_55 : f32 to vector<4x1xf32>
    %378 = arith.addf %374, %377 : vector<4x1xf32>
    %379 = math.rsqrt %378 : vector<4x1xf32>
    %380 = vector.broadcast %379 : vector<4x1xf32> to vector<4x128xf32>
    %381 = arith.mulf %376, %380 : vector<4x128xf32>
    %382 = vector.broadcast %362 : vector<4x1xf32> to vector<4x128xf32>
    %383 = arith.mulf %381, %382 : vector<4x128xf32>
    %384 = vector.broadcast %363 : vector<4x1xf32> to vector<4x128xf32>
    %385 = arith.addf %383, %384 : vector<4x128xf32>
    %cst_56 = arith.constant 0.000000e+00 : f32
    %386 = vector.broadcast %cst_56 : f32 to vector<4x128xf32>
    %387 = arith.maximumf %385, %386 : vector<4x128xf32>
    %c0_57 = arith.constant 0 : index
    %c0_58 = arith.constant 0 : index
    %388 = vector.load %arg10[%c0_57, %c0_58] : memref<16x4xf32, #tpu.memory_space<vmem>>, vector<16x4xf32>
    %389 = vector.extract_strided_slice %388 {offsets = [0, 0], sizes = [16, 1], strides = [1, 1]} : vector<16x4xf32> to vector<16x1xf32>
    %390 = vector.extract_strided_slice %387 {offsets = [0, 0], sizes = [1, 128], strides = [1, 1]} : vector<4x128xf32> to vector<1x128xf32>
    %391 = vector.broadcast %389 : vector<16x1xf32> to vector<16x128xf32>
    %392 = vector.broadcast %390 : vector<1x128xf32> to vector<16x128xf32>
    %393 = arith.mulf %391, %392 : vector<16x128xf32>
    %394 = vector.extract_strided_slice %388 {offsets = [0, 1], sizes = [16, 1], strides = [1, 1]} : vector<16x4xf32> to vector<16x1xf32>
    %395 = vector.extract_strided_slice %387 {offsets = [1, 0], sizes = [1, 128], strides = [1, 1]} : vector<4x128xf32> to vector<1x128xf32>
    %396 = vector.broadcast %394 : vector<16x1xf32> to vector<16x128xf32>
    %397 = vector.broadcast %395 : vector<1x128xf32> to vector<16x128xf32>
    %398 = arith.mulf %396, %397 : vector<16x128xf32>
    %399 = arith.addf %393, %398 : vector<16x128xf32>
    %400 = vector.extract_strided_slice %388 {offsets = [0, 2], sizes = [16, 1], strides = [1, 1]} : vector<16x4xf32> to vector<16x1xf32>
    %401 = vector.extract_strided_slice %387 {offsets = [2, 0], sizes = [1, 128], strides = [1, 1]} : vector<4x128xf32> to vector<1x128xf32>
    %402 = vector.broadcast %400 : vector<16x1xf32> to vector<16x128xf32>
    %403 = vector.broadcast %401 : vector<1x128xf32> to vector<16x128xf32>
    %404 = arith.mulf %402, %403 : vector<16x128xf32>
    %405 = arith.addf %399, %404 : vector<16x128xf32>
    %406 = vector.extract_strided_slice %388 {offsets = [0, 3], sizes = [16, 1], strides = [1, 1]} : vector<16x4xf32> to vector<16x1xf32>
    %407 = vector.extract_strided_slice %387 {offsets = [3, 0], sizes = [1, 128], strides = [1, 1]} : vector<4x128xf32> to vector<1x128xf32>
    %408 = vector.broadcast %406 : vector<16x1xf32> to vector<16x128xf32>
    %409 = vector.broadcast %407 : vector<1x128xf32> to vector<16x128xf32>
    %410 = arith.mulf %408, %409 : vector<16x128xf32>
    %411 = arith.addf %405, %410 : vector<16x128xf32>
    %c0_59 = arith.constant 0 : index
    %c0_60 = arith.constant 0 : index
    %412 = vector.load %arg11[%c0_59, %c0_60] : memref<16x1xf32, #tpu.memory_space<vmem>>, vector<16x1xf32>
    %c0_61 = arith.constant 0 : index
    %c0_62 = arith.constant 0 : index
    %413 = vector.load %arg12[%c0_61, %c0_62] : memref<16x1xf32, #tpu.memory_space<vmem>>, vector<16x1xf32>
    %cst_63 = arith.constant dense<0.000000e+00> : vector<16xf32>
    %414 = vector.multi_reduction <add>, %411, %cst_63 [1] : vector<16x128xf32> to vector<16xf32>
    %415 = vector.shape_cast %414 : vector<16xf32> to vector<16x1xf32>
    %cst_64 = arith.constant 1.280000e+02 : f32
    %416 = vector.broadcast %cst_64 : f32 to vector<16x1xf32>
    %417 = arith.divf %415, %416 : vector<16x1xf32>
    %418 = vector.broadcast %417 : vector<16x1xf32> to vector<16x128xf32>
    %419 = arith.subf %411, %418 : vector<16x128xf32>
    %420 = arith.mulf %419, %419 : vector<16x128xf32>
    %cst_65 = arith.constant dense<0.000000e+00> : vector<16xf32>
    %421 = vector.multi_reduction <add>, %420, %cst_65 [1] : vector<16x128xf32> to vector<16xf32>
    %422 = vector.shape_cast %421 : vector<16xf32> to vector<16x1xf32>
    %cst_66 = arith.constant 1.280000e+02 : f32
    %423 = vector.broadcast %cst_66 : f32 to vector<16x1xf32>
    %424 = arith.divf %422, %423 : vector<16x1xf32>
    %425 = vector.broadcast %417 : vector<16x1xf32> to vector<16x128xf32>
    %426 = arith.subf %411, %425 : vector<16x128xf32>
    %cst_67 = arith.constant 9.99999974E-6 : f32
    %427 = vector.broadcast %cst_67 : f32 to vector<16x1xf32>
    %428 = arith.addf %424, %427 : vector<16x1xf32>
    %429 = math.rsqrt %428 : vector<16x1xf32>
    %430 = vector.broadcast %429 : vector<16x1xf32> to vector<16x128xf32>
    %431 = arith.mulf %426, %430 : vector<16x128xf32>
    %432 = vector.broadcast %412 : vector<16x1xf32> to vector<16x128xf32>
    %433 = arith.mulf %431, %432 : vector<16x128xf32>
    %434 = vector.broadcast %413 : vector<16x1xf32> to vector<16x128xf32>
    %435 = arith.addf %433, %434 : vector<16x128xf32>
    %c0_68 = arith.constant 0 : index
    %c0_69 = arith.constant 0 : index
    %436 = vector.load %arg13[%c0_68, %c0_69] : memref<16x4xf32, #tpu.memory_space<vmem>>, vector<16x4xf32>
    %437 = vector.extract_strided_slice %436 {offsets = [0, 0], sizes = [16, 1], strides = [1, 1]} : vector<16x4xf32> to vector<16x1xf32>
    %438 = vector.extract_strided_slice %361 {offsets = [0, 0], sizes = [1, 128], strides = [1, 1]} : vector<4x128xf32> to vector<1x128xf32>
    %439 = vector.broadcast %437 : vector<16x1xf32> to vector<16x128xf32>
    %440 = vector.broadcast %438 : vector<1x128xf32> to vector<16x128xf32>
    %441 = arith.mulf %439, %440 : vector<16x128xf32>
    %442 = vector.extract_strided_slice %436 {offsets = [0, 1], sizes = [16, 1], strides = [1, 1]} : vector<16x4xf32> to vector<16x1xf32>
    %443 = vector.extract_strided_slice %361 {offsets = [1, 0], sizes = [1, 128], strides = [1, 1]} : vector<4x128xf32> to vector<1x128xf32>
    %444 = vector.broadcast %442 : vector<16x1xf32> to vector<16x128xf32>
    %445 = vector.broadcast %443 : vector<1x128xf32> to vector<16x128xf32>
    %446 = arith.mulf %444, %445 : vector<16x128xf32>
    %447 = arith.addf %441, %446 : vector<16x128xf32>
    %448 = vector.extract_strided_slice %436 {offsets = [0, 2], sizes = [16, 1], strides = [1, 1]} : vector<16x4xf32> to vector<16x1xf32>
    %449 = vector.extract_strided_slice %361 {offsets = [2, 0], sizes = [1, 128], strides = [1, 1]} : vector<4x128xf32> to vector<1x128xf32>
    %450 = vector.broadcast %448 : vector<16x1xf32> to vector<16x128xf32>
    %451 = vector.broadcast %449 : vector<1x128xf32> to vector<16x128xf32>
    %452 = arith.mulf %450, %451 : vector<16x128xf32>
    %453 = arith.addf %447, %452 : vector<16x128xf32>
    %454 = vector.extract_strided_slice %436 {offsets = [0, 3], sizes = [16, 1], strides = [1, 1]} : vector<16x4xf32> to vector<16x1xf32>
    %455 = vector.extract_strided_slice %361 {offsets = [3, 0], sizes = [1, 128], strides = [1, 1]} : vector<4x128xf32> to vector<1x128xf32>
    %456 = vector.broadcast %454 : vector<16x1xf32> to vector<16x128xf32>
    %457 = vector.broadcast %455 : vector<1x128xf32> to vector<16x128xf32>
    %458 = arith.mulf %456, %457 : vector<16x128xf32>
    %459 = arith.addf %453, %458 : vector<16x128xf32>
    %460 = arith.addf %435, %459 : vector<16x128xf32>
    %c0_70 = arith.constant 0 : index
    %c0_71 = arith.constant 0 : index
    %461 = vector.load %arg16[%c0_70, %c0_71] : memref<16x128xf32, #tpu.memory_space<vmem>>, vector<16x128xf32>
    tpu.vector_store %arg16[%c0_70, %c0_71], %460 {strides = array<i32>} : memref<16x128xf32, #tpu.memory_space<vmem>>, vector<16x128xf32>,
    return
  }
  func.func @transform_0(%arg0: i32) -> (i32, i32) {
    %c0_i32 = arith.constant 0 : i32
    %c0_i32_0 = arith.constant 0 : i32
    %c0_i32_1 = arith.constant 0 : i32
    return %c0_i32, %c0_i32_0 : i32, i32
  }
  func.func @transform_1(%arg0: i32) -> (i32, i32) {
    %c0_i32 = arith.constant 0 : i32
    %c0_i32_0 = arith.constant 0 : i32
    %c0_i32_1 = arith.constant 0 : i32
    return %c0_i32, %c0_i32_0 : i32, i32
  }
  func.func @transform_2(%arg0: i32) -> (i32, i32) {
    %c0_i32 = arith.constant 0 : i32
    %c0_i32_0 = arith.constant 0 : i32
    %c0_i32_1 = arith.constant 0 : i32
    return %c0_i32, %c0_i32_0 : i32, i32
  }
  func.func @transform_3(%arg0: i32) -> (i32, i32) {
    %c0_i32 = arith.constant 0 : i32
    %c0_i32_0 = arith.constant 0 : i32
    %c0_i32_1 = arith.constant 0 : i32
    return %c0_i32, %c0_i32_0 : i32, i32
  }
  func.func @transform_4(%arg0: i32) -> (i32, i32) {
    %c0_i32 = arith.constant 0 : i32
    %c0_i32_0 = arith.constant 0 : i32
    %c0_i32_1 = arith.constant 0 : i32
    return %c0_i32, %c0_i32_0 : i32, i32
  }
  func.func @transform_5(%arg0: i32) -> (i32, i32) {
    %c0_i32 = arith.constant 0 : i32
    %c0_i32_0 = arith.constant 0 : i32
    %c0_i32_1 = arith.constant 0 : i32
    return %c0_i32, %c0_i32_0 : i32, i32
  }
  func.func @transform_6(%arg0: i32) -> (i32, i32, i32) {
    %c0_i32 = arith.constant 0 : i32
    %c0_i32_0 = arith.constant 0 : i32
    %c0_i32_1 = arith.constant 0 : i32
    %c0_i32_2 = arith.constant 0 : i32
    return %c0_i32, %c0_i32_0, %c0_i32_1 : i32, i32, i32
  }
  func.func @transform_7(%arg0: i32) -> (i32, i32) {
    %c0_i32 = arith.constant 0 : i32
    %c0_i32_0 = arith.constant 0 : i32
    %c0_i32_1 = arith.constant 0 : i32
    return %c0_i32, %c0_i32_0 : i32, i32
  }
  func.func @transform_8(%arg0: i32) -> (i32, i32) {
    %c0_i32 = arith.constant 0 : i32
    %c0_i32_0 = arith.constant 0 : i32
    %c0_i32_1 = arith.constant 0 : i32
    return %c0_i32, %c0_i32_0 : i32, i32
  }
  func.func @transform_9(%arg0: i32) -> (i32, i32) {
    %c0_i32 = arith.constant 0 : i32
    %c0_i32_0 = arith.constant 0 : i32
    %c0_i32_1 = arith.constant 0 : i32
    return %c0_i32, %c0_i32_0 : i32, i32
  }
  func.func @transform_10(%arg0: i32) -> (i32, i32) {
    %c0_i32 = arith.constant 0 : i32
    %c0_i32_0 = arith.constant 0 : i32
    %c0_i32_1 = arith.constant 0 : i32
    return %c0_i32, %c0_i32_0 : i32, i32
  }
  func.func @transform_11(%arg0: i32) -> (i32, i32) {
    %c0_i32 = arith.constant 0 : i32
    %c0_i32_0 = arith.constant 0 : i32
    %c0_i32_1 = arith.constant 0 : i32
    return %c0_i32, %c0_i32_0 : i32, i32
  }
  func.func @transform_12(%arg0: i32) -> (i32, i32) {
    %c0_i32 = arith.constant 0 : i32
    %c0_i32_0 = arith.constant 0 : i32
    %c0_i32_1 = arith.constant 0 : i32
    return %c0_i32, %c0_i32_0 : i32, i32
  }
  func.func @transform_13(%arg0: i32) -> (i32, i32) {
    %c0_i32 = arith.constant 0 : i32
    %c0_i32_0 = arith.constant 0 : i32
    %c0_i32_1 = arith.constant 0 : i32
    return %c0_i32, %c0_i32_0 : i32, i32
  }
  func.func @transform_14(%arg0: i32) -> (i32, i32) {
    %c0_i32 = arith.constant 0 : i32
    %c0_i32_0 = arith.constant 0 : i32
    %c0_i32_1 = arith.constant 0 : i32
    return %c0_i32, %c0_i32_0 : i32, i32
  }
  func.func @transform_15(%arg0: i32) -> (i32, i32) {
    %c0_i32 = arith.constant 0 : i32
    %c0_i32_0 = arith.constant 0 : i32
    %c0_i32_1 = arith.constant 0 : i32
    return %c0_i32, %c0_i32_0 : i32, i32
  }
}

</mosaic_0001>

<llo_original>
// kernel: bottleneck_block_forward.1
$region0: #{bottleneck_block_forward.1}
  #allocation0 [shape = 'u32[]', space=smem, size = 0x4, offset = 0x4, fixed_abs, tag = 'smem constant byte address 0x4 - core index']
  #allocation1 [shape = 'u32[144,128]{1,0:T(1,128)}', space=vmem, size = 0x12000, scoped, tag = 'internal scratch']
  %s0 = inlined_call_operand.vmem [shape: f32[4,512], index: 0, kind: input, shape index: {}]
  %s1 = inlined_call_operand.vmem [shape: f32[4,1], index: 1, kind: input, shape index: {}]
  %s2 = inlined_call_operand.vmem [shape: f32[4,1], index: 2, kind: input, shape index: {}]
  %s3 = inlined_call_operand.vmem [shape: f32[4,4], index: 3, kind: input, shape index: {}]
  %s4 = inlined_call_operand.vmem [shape: f32[4,1], index: 4, kind: input, shape index: {}]
  %s5 = inlined_call_operand.vmem [shape: f32[4,1], index: 5, kind: input, shape index: {}]
  %s6 = inlined_call_operand.vmem [shape: f32[9,4,4], index: 6, kind: input, shape index: {}]
  %s7 = inlined_call_operand.vmem [shape: f32[4,1], index: 7, kind: input, shape index: {}]
  %s8 = inlined_call_operand.vmem [shape: f32[4,1], index: 8, kind: input, shape index: {}]
  %s9 = inlined_call_operand.vmem [shape: f32[16,4], index: 9, kind: input, shape index: {}]
  %s10 = inlined_call_operand.vmem [shape: f32[16,1], index: 10, kind: input, shape index: {}]
  %s11 = inlined_call_operand.vmem [shape: f32[16,1], index: 11, kind: input, shape index: {}]
  %s12 = inlined_call_operand.vmem [shape: f32[16,4], index: 12, kind: input, shape index: {}]
  %s13 = inlined_call_operand.vmem [shape: f32[512,128], index: 13, kind: input, shape index: {}]
  %s14 = inlined_call_operand.vmem [shape: f32[4,512], index: 14, kind: input, shape index: {}]
  %s15 = inlined_call_operand.vmem [shape: f32[16,128], index: 15, kind: output, shape index: {}]
  %s16 = sld [smem:[#allocation0]]
  $region70: #{bottleneck_block_forward.1} parent=0
    _
  %s18 = ssub.s32 1, %s16
  %s19 = scalar_select 0, %s18, %s16
  // Predicated region
  $region2: #{bottleneck_block_forward.1} parent=0 // pred_check
    _
  $region3: #{bottleneck_block_forward.1} parent=0 // pred_check_branch
    %21 = sbr.rel (0) target = $region5
  $region4: #{bottleneck_block_forward.1} parent=0 // pred_region
    _
  $region5: #{bottleneck_block_forward.1} parent=0 // pred_fallthru
    _
  // Predicated region
  $region6: #{bottleneck_block_forward.1} parent=0 // pred_check
    _
  $region7: #{bottleneck_block_forward.1} parent=0 // pred_check_branch
    %23 = sbr.rel (0) target = $region9
  $region8: #{bottleneck_block_forward.1} parent=0 // pred_region
    _
  $region9: #{bottleneck_block_forward.1} parent=0 // pred_fallthru
    _
  // Predicated region
  $region10: #{bottleneck_block_forward.1} parent=0 // pred_check
    _
  $region11: #{bottleneck_block_forward.1} parent=0 // pred_check_branch
    %25 = sbr.rel (0) target = $region13
  $region12: #{bottleneck_block_forward.1} parent=0 // pred_region
    _
  $region13: #{bottleneck_block_forward.1} parent=0 // pred_fallthru
    _
  // Predicated region
  $region14: #{bottleneck_block_forward.1} parent=0 // pred_check
    _
  $region15: #{bottleneck_block_forward.1} parent=0 // pred_check_branch
    %27 = sbr.rel (0) target = $region17
  $region16: #{bottleneck_block_forward.1} parent=0 // pred_region
    _
  $region17: #{bottleneck_block_forward.1} parent=0 // pred_fallthru
    _
  // Predicated region
  $region18: #{bottleneck_block_forward.1} parent=0 // pred_check
    _
  $region19: #{bottleneck_block_forward.1} parent=0 // pred_check_branch
    %29 = sbr.rel (0) target = $region21
  $region20: #{bottleneck_block_forward.1} parent=0 // pred_region
    _
  $region21: #{bottleneck_block_forward.1} parent=0 // pred_fallthru
    _
  // Predicated region
  $region22: #{bottleneck_block_forward.1} parent=0 // pred_check
    _
  $region23: #{bottleneck_block_forward.1} parent=0 // pred_check_branch
    %31 = sbr.rel (0) target = $region25
  $region24: #{bottleneck_block_forward.1} parent=0 // pred_region
    _
  $region25: #{bottleneck_block_forward.1} parent=0 // pred_fallthru
    _
  // Predicated region
  $region26: #{bottleneck_block_forward.1} parent=0 // pred_check
    _
  $region27: #{bottleneck_block_forward.1} parent=0 // pred_check_branch
    %33 = sbr.rel (0) target = $region29
  $region28: #{bottleneck_block_forward.1} parent=0 // pred_region
    _
  $region29: #{bottleneck_block_forward.1} parent=0 // pred_fallthru
    _
  // Predicated region
  $region30: #{bottleneck_block_forward.1} parent=0 // pred_check
    _
  $region31: #{bottleneck_block_forward.1} parent=0 // pred_check_branch
    %35 = sbr.rel (0) target = $region33
  $region32: #{bottleneck_block_forward.1} parent=0 // pred_region
    _
  $region33: #{bottleneck_block_forward.1} parent=0 // pred_fallthru
    _
  // Predicated region
  $region34: #{bottleneck_block_forward.1} parent=0 // pred_check
    _
  $region35: #{bottleneck_block_forward.1} parent=0 // pred_check_branch
    %37 = sbr.rel (0) target = $region37
  $region36: #{bottleneck_block_forward.1} parent=0 // pred_region
    _
  $region37: #{bottleneck_block_forward.1} parent=0 // pred_fallthru
    _
  // Predicated region
  $region38: #{bottleneck_block_forward.1} parent=0 // pred_check
    _
  $region39: #{bottleneck_block_forward.1} parent=0 // pred_check_branch
    %39 = sbr.rel (0) target = $region41
  $region40: #{bottleneck_block_forward.1} parent=0 // pred_region
    _
  $region41: #{bottleneck_block_forward.1} parent=0 // pred_fallthru
    _
  // Predicated region
  $region42: #{bottleneck_block_forward.1} parent=0 // pred_check
    _
  $region43: #{bottleneck_block_forward.1} parent=0 // pred_check_branch
    %41 = sbr.rel (0) target = $region45
  $region44: #{bottleneck_block_forward.1} parent=0 // pred_region
    _
  $region45: #{bottleneck_block_forward.1} parent=0 // pred_fallthru
    _
  // Predicated region
  $region46: #{bottleneck_block_forward.1} parent=0 // pred_check
    _
  $region47: #{bottleneck_block_forward.1} parent=0 // pred_check_branch
    %43 = sbr.rel (0) target = $region49
  $region48: #{bottleneck_block_forward.1} parent=0 // pred_region
    _
  $region49: #{bottleneck_block_forward.1} parent=0 // pred_fallthru
    _
  // Predicated region
  $region50: #{bottleneck_block_forward.1} parent=0 // pred_check
    _
  $region51: #{bottleneck_block_forward.1} parent=0 // pred_check_branch
    %45 = sbr.rel (0) target = $region53
  $region52: #{bottleneck_block_forward.1} parent=0 // pred_region
    _
  $region53: #{bottleneck_block_forward.1} parent=0 // pred_fallthru
    _
  // Predicated region
  $region54: #{bottleneck_block_forward.1} parent=0 // pred_check
    _
  $region55: #{bottleneck_block_forward.1} parent=0 // pred_check_branch
    %47 = sbr.rel (0) target = $region57
  $region56: #{bottleneck_block_forward.1} parent=0 // pred_region
    _
  $region57: #{bottleneck_block_forward.1} parent=0 // pred_fallthru
    _
  // Predicated region
  $region58: #{bottleneck_block_forward.1} parent=0 // pred_check
    _
  $region59: #{bottleneck_block_forward.1} parent=0 // pred_check_branch
    %49 = sbr.rel (0) target = $region61
  $region60: #{bottleneck_block_forward.1} parent=0 // pred_region
    _
  $region61: #{bottleneck_block_forward.1} parent=0 // pred_fallthru
    _
  %v50 = vld [vmem:[%s0] sm:$0xff]
  %v51 = vld [vmem:[%s0 + $0x8] sm:$0xff]
  %v52 = vld [vmem:[%s1] sm:$0xf]
  %v53 = vld [vmem:[%s2] sm:$0xf]
  %v56 = vcombine.high %v50, %v50
  %v57 = vcombine.high %v51, %v51
  %vm60 = vcmask 1043456
  %v61 = vsel %vm60, %v50, 0.0
  %v62 = vsel %vm60, %v56, 0.0
  %v63 = vadd.f32 %v61, %v62
  %v64 = vsel %vm60, %v51, 0.0
  %v65 = vadd.f32 %v63, %v64
  %v66 = vsel %vm60, %v57, 0.0
  %v67 = vadd.f32 %v65, %v66
  %68 = vadd.xlane.f32.xlu0 %v67
  %v69 = vpop.xlane.xlu0 %68
  %v70 = vrcp.pop 512.0
  %v71 = vmul.f32 %v69, %v70
  %v74 = vunpack.c.l.s4 839922192
  %v75 = vunpack.c.0.s8 %v74
  %v76 = vlaneseq
  %v77 = vshrl.u32 %v76, 7
  %v78 = vsub.s32 %v75, %v77
  %v79 = vrot.slane %v71, %v78
  %v81 = vsub.f32 %v50, %v79
  %v82 = vsub.f32 %v51, %v79
  %v83 = vmul.f32 %v81, %v81
  %v84 = vmul.f32 %v82, %v82
  %v87 = vcombine.high %v83, %v83
  %v88 = vcombine.high %v84, %v84
  %v91 = vsel %vm60, %v83, 0.0
  %v92 = vsel %vm60, %v87, 0.0
  %v93 = vadd.f32 %v91, %v92
  %v94 = vsel %vm60, %v84, 0.0
  %v95 = vadd.f32 %v93, %v94
  %v96 = vsel %vm60, %v88, 0.0
  %v97 = vadd.f32 %v95, %v96
  %98 = vadd.xlane.f32.xlu0 %v97
  %v99 = vpop.xlane.xlu0 %98
  %v100 = vmul.f32 %v99, %v70
  %v101 = vadd.f32 %v100, 1e-05
  %v102 = vrsqrt.pop %v101
  %v105 = vunpack.c.l.s4 839922192
  %v106 = vunpack.c.0.s8 %v105
  %v107 = vlaneseq
  %v108 = vshrl.u32 %v107, 7
  %v109 = vsub.s32 %v106, %v108
  %v110 = vrot.slane %v102, %v109
  %v112 = vmul.f32 %v81, %v110
  %v113 = vmul.f32 %v82, %v110
  %115 = vset.pattern.permute.xlu0 0
  %116 = vperm.xlu0 %115, %v52
  %v117 = vpop.permute.xlu0 %116
  %v119 = vunpack.c.l.s4 839922192
  %v120 = vunpack.c.0.s8 %v119
  %v121 = vlaneseq
  %v122 = vshrl.u32 %v121, 7
  %v123 = vsub.s32 %v120, %v122
  %v124 = vrot.slane %v117, %v123
  %v126 = vmul.f32 %v112, %v124
  %v127 = vmul.f32 %v113, %v124
  %129 = vset.pattern.permute.xlu0 0
  %130 = vperm.xlu0 %129, %v53
  %v131 = vpop.permute.xlu0 %130
  %v133 = vunpack.c.l.s4 839922192
  %v134 = vunpack.c.0.s8 %v133
  %v135 = vlaneseq
  %v136 = vshrl.u32 %v135, 7
  %v137 = vsub.s32 %v134, %v136
  %v138 = vrot.slane %v131, %v137
  %v140 = vadd.f32 %v126, %v138
  %v141 = vadd.f32 %v127, %v138
  %v142 = vmax.f32 %v140, 0.0
  %v143 = vmax.f32 %v141, 0.0
  %v144 = vld [vmem:[%s3] sm:$0xf]
  %146 = vset.pattern.permute.xlu0 0
  %147 = vperm.xlu0 %146, %v144
  %v148 = vpop.permute.xlu0 %147
  %v152 = vlaneseq
  %v153 = vshrl.u32 %v152, 7
  %v154 = vsub.s32 0, %v153
  %v155 = vrot.slane %v142, %v154
  %v156 = vlaneseq
  %v157 = vshrl.u32 %v156, 7
  %v158 = vsub.s32 4, %v157
  %v159 = vrot.slane %v142, %v158
  %v160 = vlaneseq
  %v161 = vshrl.u32 %v160, 7
  %v162 = vsub.s32 0, %v161
  %v163 = vrot.slane %v143, %v162
  %v164 = vlaneseq
  %v165 = vshrl.u32 %v164, 7
  %v166 = vsub.s32 4, %v165
  %v167 = vrot.slane %v143, %v166
  %v172 = vlaneseq
  %v173 = vshrl.u32 %v172, 7
  %v174 = vsub.s32 0, %v173
  %v175 = vrot.slane %v155, %v174
  %v176 = vlaneseq
  %v177 = vshrl.u32 %v176, 7
  %v178 = vsub.s32 0, %v177
  %v179 = vrot.slane %v159, %v178
  %v180 = vlaneseq
  %v181 = vshrl.u32 %v180, 7
  %v182 = vsub.s32 0, %v181
  %v183 = vrot.slane %v163, %v182
  %v184 = vlaneseq
  %v185 = vshrl.u32 %v184, 7
  %v186 = vsub.s32 0, %v185
  %v187 = vrot.slane %v167, %v186
  %v188 = vmul.f32 %v148, %v175
  %v189 = vmul.f32 %v148, %v179
  %v190 = vmul.f32 %v148, %v183
  %v191 = vmul.f32 %v148, %v187
  %192 = vset.pattern.permute.xlu0 1
  %193 = vperm.xlu0 %192, %v144
  %v194 = vpop.permute.xlu0 %193
  %v196 = vlaneseq
  %v197 = vshrl.u32 %v196, 7
  %v198 = vsub.s32 1, %v197
  %v199 = vrot.slane %v142, %v198
  %v200 = vlaneseq
  %v201 = vshrl.u32 %v200, 7
  %v202 = vsub.s32 5, %v201
  %v203 = vrot.slane %v142, %v202
  %v204 = vlaneseq
  %v205 = vshrl.u32 %v204, 7
  %v206 = vsub.s32 1, %v205
  %v207 = vrot.slane %v143, %v206
  %v208 = vlaneseq
  %v209 = vshrl.u32 %v208, 7
  %v210 = vsub.s32 5, %v209
  %v211 = vrot.slane %v143, %v210
  %v216 = vlaneseq
  %v217 = vshrl.u32 %v216, 7
  %v218 = vsub.s32 1, %v217
  %v219 = vrot.slane %v199, %v218
  %v220 = vlaneseq
  %v221 = vshrl.u32 %v220, 7
  %v222 = vsub.s32 1, %v221
  %v223 = vrot.slane %v203, %v222
  %v224 = vlaneseq
  %v225 = vshrl.u32 %v224, 7
  %v226 = vsub.s32 1, %v225
  %v227 = vrot.slane %v207, %v226
  %v228 = vlaneseq
  %v229 = vshrl.u32 %v228, 7
  %v230 = vsub.s32 1, %v229
  %v231 = vrot.slane %v211, %v230
  %v232 = vmul.f32 %v194, %v219
  %v233 = vmul.f32 %v194, %v223
  %v234 = vmul.f32 %v194, %v227
  %v235 = vmul.f32 %v194, %v231
  %v236 = vadd.f32 %v188, %v232
  %v237 = vadd.f32 %v189, %v233
  %v238 = vadd.f32 %v190, %v234
  %v239 = vadd.f32 %v191, %v235
  %240 = vset.pattern.permute.xlu0 2
  %241 = vperm.xlu0 %240, %v144
  %v242 = vpop.permute.xlu0 %241
  %v244 = vlaneseq
  %v245 = vshrl.u32 %v244, 7
  %v246 = vsub.s32 2, %v245
  %v247 = vrot.slane %v142, %v246
  %v248 = vlaneseq
  %v249 = vshrl.u32 %v248, 7
  %v250 = vsub.s32 6, %v249
  %v251 = vrot.slane %v142, %v250
  %v252 = vlaneseq
  %v253 = vshrl.u32 %v252, 7
  %v254 = vsub.s32 2, %v253
  %v255 = vrot.slane %v143, %v254
  %v256 = vlaneseq
  %v257 = vshrl.u32 %v256, 7
  %v258 = vsub.s32 6, %v257
  %v259 = vrot.slane %v143, %v258
  %v264 = vlaneseq
  %v265 = vshrl.u32 %v264, 7
  %v266 = vsub.s32 2, %v265
  %v267 = vrot.slane %v247, %v266
  %v268 = vlaneseq
  %v269 = vshrl.u32 %v268, 7
  %v270 = vsub.s32 2, %v269
  %v271 = vrot.slane %v251, %v270
  %v272 = vlaneseq
  %v273 = vshrl.u32 %v272, 7
  %v274 = vsub.s32 2, %v273
  %v275 = vrot.slane %v255, %v274
  %v276 = vlaneseq
  %v277 = vshrl.u32 %v276, 7
  %v278 = vsub.s32 2, %v277
  %v279 = vrot.slane %v259, %v278
  %v280 = vmul.f32 %v242, %v267
  %v281 = vmul.f32 %v242, %v271
  %v282 = vmul.f32 %v242, %v275
  %v283 = vmul.f32 %v242, %v279
  %v284 = vadd.f32 %v236, %v280
  %v285 = vadd.f32 %v237, %v281
  %v286 = vadd.f32 %v238, %v282
  %v287 = vadd.f32 %v239, %v283
  %288 = vset.pattern.permute.xlu0 3
  %289 = vperm.xlu0 %288, %v144
  %v290 = vpop.permute.xlu0 %289
  %v292 = vlaneseq
  %v293 = vshrl.u32 %v292, 7
  %v294 = vsub.s32 3, %v293
  %v295 = vrot.slane %v142, %v294
  %v296 = vlaneseq
  %v297 = vshrl.u32 %v296, 7
  %v298 = vsub.s32 7, %v297
  %v299 = vrot.slane %v142, %v298
  %v300 = vlaneseq
  %v301 = vshrl.u32 %v300, 7
  %v302 = vsub.s32 3, %v301
  %v303 = vrot.slane %v143, %v302
  %v304 = vlaneseq
  %v305 = vshrl.u32 %v304, 7
  %v306 = vsub.s32 7, %v305
  %v307 = vrot.slane %v143, %v306
  %v312 = vlaneseq
  %v313 = vshrl.u32 %v312, 7
  %v314 = vsub.s32 3, %v313
  %v315 = vrot.slane %v295, %v314
  %v316 = vlaneseq
  %v317 = vshrl.u32 %v316, 7
  %v318 = vsub.s32 3, %v317
  %v319 = vrot.slane %v299, %v318
  %v320 = vlaneseq
  %v321 = vshrl.u32 %v320, 7
  %v322 = vsub.s32 3, %v321
  %v323 = vrot.slane %v303, %v322
  %v324 = vlaneseq
  %v325 = vshrl.u32 %v324, 7
  %v326 = vsub.s32 3, %v325
  %v327 = vrot.slane %v307, %v326
  %v328 = vmul.f32 %v290, %v315
  %v329 = vmul.f32 %v290, %v319
  %v330 = vmul.f32 %v290, %v323
  %v331 = vmul.f32 %v290, %v327
  %v332 = vadd.f32 %v284, %v328
  %v333 = vadd.f32 %v285, %v329
  %v334 = vadd.f32 %v286, %v330
  %v335 = vadd.f32 %v287, %v331
  %v336 = vld [vmem:[%s4] sm:$0xf]
  %v337 = vld [vmem:[%s5] sm:$0xf]
  %v338 = vsel %vm60, %v332, 0.0
  %v339 = vsel %vm60, %v333, 0.0
  %v340 = vadd.f32 %v338, %v339
  %v341 = vsel %vm60, %v334, 0.0
  %v342 = vadd.f32 %v340, %v341
  %v343 = vsel %vm60, %v335, 0.0
  %v344 = vadd.f32 %v342, %v343
  %345 = vadd.xlane.f32.xlu0 %v344
  %v346 = vpop.xlane.xlu0 %345
  %v347 = vmul.f32 %v346, %v70
  %v348 = vsub.f32 %v332, %v347
  %v349 = vsub.f32 %v333, %v347
  %v350 = vsub.f32 %v334, %v347
  %v351 = vsub.f32 %v335, %v347
  %v352 = vmul.f32 %v348, %v348
  %v353 = vmul.f32 %v349, %v349
  %v354 = vmul.f32 %v350, %v350
  %v355 = vmul.f32 %v351, %v351
  %v356 = vsel %vm60, %v352, 0.0
  %v357 = vsel %vm60, %v353, 0.0
  %v358 = vadd.f32 %v356, %v357
  %v359 = vsel %vm60, %v354, 0.0
  %v360 = vadd.f32 %v358, %v359
  %v361 = vsel %vm60, %v355, 0.0
  %v362 = vadd.f32 %v360, %v361
  %363 = vadd.xlane.f32.xlu0 %v362
  %v364 = vpop.xlane.xlu0 %363
  %v365 = vmul.f32 %v364, %v70
  %v366 = vadd.f32 %v365, 1e-05
  %v367 = vrsqrt.pop %v366
  %v368 = vmul.f32 %v348, %v367
  %v369 = vmul.f32 %v349, %v367
  %v370 = vmul.f32 %v350, %v367
  %v371 = vmul.f32 %v351, %v367
  %373 = vset.pattern.permute.xlu0 0
  %374 = vperm.xlu0 %373, %v336
  %v375 = vpop.permute.xlu0 %374
  %v377 = vmul.f32 %v368, %v375
  %v378 = vmul.f32 %v369, %v375
  %v379 = vmul.f32 %v370, %v375
  %v380 = vmul.f32 %v371, %v375
  %382 = vset.pattern.permute.xlu0 0
  %383 = vperm.xlu0 %382, %v337
  %v384 = vpop.permute.xlu0 %383
  %v386 = vadd.f32 %v377, %v384
  %v387 = vadd.f32 %v378, %v384
  %v388 = vadd.f32 %v379, %v384
  %v389 = vadd.f32 %v380, %v384
  %v390 = vmax.f32 %v386, 0.0
  %v391 = vmax.f32 %v387, 0.0
  %v392 = vmax.f32 %v388, 0.0
  %v393 = vmax.f32 %v389, 0.0
  %v394 = vld [vmem:[%s14] sm:$0xff]
  %v395 = vld [vmem:[%s14 + $0x8] sm:$0xff]
  %397 = vrot.lane.b32.xlu0 %v393, 17
  %v398 = vpop.permute.xlu0 %397
  %403 = vrot.lane.b32.xlu0 %v390, 17
  %v404 = vpop.permute.xlu0 %403
  %405 = vrot.lane.b32.xlu0 %v391, 17
  %v406 = vpop.permute.xlu0 %405
  %407 = vrot.lane.b32.xlu0 %v392, 17
  %v408 = vpop.permute.xlu0 %407
  %vm409 = vcmask 138240
  %v410 = vsel %vm409, %v404, %v406
  %v411 = vsel %vm409, %v406, %v408
  %v412 = vsel %vm409, %v408, %v398
  %v417 = vsel %vm409, %v398, %v404
  %v420 = vrot.slane %v394, 6
  %v421 = vrot.slane %v420, 4
  %v422 = vrot.slane %v395, 6
  %v423 = vrot.slane %v422, 4
  %v426 = vmul.f32 %v394, %v421
  %v427 = vmul.f32 %v395, %v423
  %v430 = vlaneseq
  %v431 = vshrl.u32 %v430, 7
  %v432 = vsub.s32 0, %v431
  %v433 = vrot.slane %v426, %v432
  %v434 = vlaneseq
  %v435 = vshrl.u32 %v434, 7
  %v436 = vsub.s32 4, %v435
  %v437 = vrot.slane %v426, %v436
  %v438 = vlaneseq
  %v439 = vshrl.u32 %v438, 7
  %v440 = vsub.s32 0, %v439
  %v441 = vrot.slane %v427, %v440
  %v442 = vlaneseq
  %v443 = vshrl.u32 %v442, 7
  %v444 = vsub.s32 4, %v443
  %v445 = vrot.slane %v427, %v444
  %v450 = vlaneseq
  %v451 = vshrl.u32 %v450, 7
  %v452 = vsub.s32 0, %v451
  %v453 = vrot.slane %v433, %v452
  %v454 = vlaneseq
  %v455 = vshrl.u32 %v454, 7
  %v456 = vsub.s32 0, %v455
  %v457 = vrot.slane %v437, %v456
  %v458 = vlaneseq
  %v459 = vshrl.u32 %v458, 7
  %v460 = vsub.s32 0, %v459
  %v461 = vrot.slane %v441, %v460
  %v462 = vlaneseq
  %v463 = vshrl.u32 %v462, 7
  %v464 = vsub.s32 0, %v463
  %v465 = vrot.slane %v445, %v464
  %v466 = vmul.f32 %v417, %v453
  %v467 = vmul.f32 %v410, %v457
  %v468 = vmul.f32 %v411, %v461
  %v469 = vmul.f32 %v412, %v465
  %v470 = vld [vmem:[%s6] sm:$0xf]
  %472 = vset.pattern.permute.xlu0 0
  %473 = vperm.xlu0 %472, %v470
  %v474 = vpop.permute.xlu0 %473
  %v476 = vlaneseq
  %v477 = vshrl.u32 %v476, 7
  %v478 = vsub.s32 0, %v477
  %v479 = vrot.slane %v466, %v478
  %v480 = vlaneseq
  %v481 = vshrl.u32 %v480, 7
  %v482 = vsub.s32 0, %v481
  %v483 = vrot.slane %v467, %v482
  %v484 = vlaneseq
  %v485 = vshrl.u32 %v484, 7
  %v486 = vsub.s32 0, %v485
  %v487 = vrot.slane %v468, %v486
  %v488 = vlaneseq
  %v489 = vshrl.u32 %v488, 7
  %v490 = vsub.s32 0, %v489
  %v491 = vrot.slane %v469, %v490
  %v492 = vmul.f32 %v474, %v479
  %v493 = vmul.f32 %v474, %v483
  %v494 = vmul.f32 %v474, %v487
  %v495 = vmul.f32 %v474, %v491
  %496 = vset.pattern.permute.xlu0 1
  %497 = vperm.xlu0 %496, %v470
  %v498 = vpop.permute.xlu0 %497
  %v500 = vlaneseq
  %v501 = vshrl.u32 %v500, 7
  %v502 = vsub.s32 1, %v501
  %v503 = vrot.slane %v466, %v502
  %v504 = vlaneseq
  %v505 = vshrl.u32 %v504, 7
  %v506 = vsub.s32 1, %v505
  %v507 = vrot.slane %v467, %v506
  %v508 = vlaneseq
  %v509 = vshrl.u32 %v508, 7
  %v510 = vsub.s32 1, %v509
  %v511 = vrot.slane %v468, %v510
  %v512 = vlaneseq
  %v513 = vshrl.u32 %v512, 7
  %v514 = vsub.s32 1, %v513
  %v515 = vrot.slane %v469, %v514
  %v516 = vmul.f32 %v498, %v503
  %v517 = vmul.f32 %v498, %v507
  %v518 = vmul.f32 %v498, %v511
  %v519 = vmul.f32 %v498, %v515
  %v520 = vadd.f32 %v492, %v516
  %v521 = vadd.f32 %v493, %v517
  %v522 = vadd.f32 %v494, %v518
  %v523 = vadd.f32 %v495, %v519
  %524 = vset.pattern.permute.xlu0 2
  %525 = vperm.xlu0 %524, %v470
  %v526 = vpop.permute.xlu0 %525
  %v528 = vlaneseq
  %v529 = vshrl.u32 %v528, 7
  %v530 = vsub.s32 2, %v529
  %v531 = vrot.slane %v466, %v530
  %v532 = vlaneseq
  %v533 = vshrl.u32 %v532, 7
  %v534 = vsub.s32 2, %v533
  %v535 = vrot.slane %v467, %v534
  %v536 = vlaneseq
  %v537 = vshrl.u32 %v536, 7
  %v538 = vsub.s32 2, %v537
  %v539 = vrot.slane %v468, %v538
  %v540 = vlaneseq
  %v541 = vshrl.u32 %v540, 7
  %v542 = vsub.s32 2, %v541
  %v543 = vrot.slane %v469, %v542
  %v544 = vmul.f32 %v526, %v531
  %v545 = vmul.f32 %v526, %v535
  %v546 = vmul.f32 %v526, %v539
  %v547 = vmul.f32 %v526, %v543
  %v548 = vadd.f32 %v520, %v544
  %v549 = vadd.f32 %v521, %v545
  %v550 = vadd.f32 %v522, %v546
  %v551 = vadd.f32 %v523, %v547
  %552 = vset.pattern.permute.xlu0 3
  %553 = vperm.xlu0 %552, %v470
  %v554 = vpop.permute.xlu0 %553
  %v556 = vlaneseq
  %v557 = vshrl.u32 %v556, 7
  %v558 = vsub.s32 3, %v557
  %v559 = vrot.slane %v466, %v558
  %v560 = vlaneseq
  %v561 = vshrl.u32 %v560, 7
  %v562 = vsub.s32 3, %v561
  %v563 = vrot.slane %v467, %v562
  %v564 = vlaneseq
  %v565 = vshrl.u32 %v564, 7
  %v566 = vsub.s32 3, %v565
  %v567 = vrot.slane %v468, %v566
  %v568 = vlaneseq
  %v569 = vshrl.u32 %v568, 7
  %v570 = vsub.s32 3, %v569
  %v571 = vrot.slane %v469, %v570
  %v572 = vmul.f32 %v554, %v559
  %v573 = vmul.f32 %v554, %v563
  %v574 = vmul.f32 %v554, %v567
  %v575 = vmul.f32 %v554, %v571
  %v576 = vadd.f32 %v548, %v572
  %v577 = vadd.f32 %v549, %v573
  %v578 = vadd.f32 %v550, %v574
  %v579 = vadd.f32 %v551, %v575
  %580 = vrot.lane.b32.xlu0 %v393, 16
  %v581 = vpop.permute.xlu0 %580
  %583 = vrot.lane.b32.xlu0 %v390, 16
  %v584 = vpop.permute.xlu0 %583
  %585 = vrot.lane.b32.xlu0 %v391, 16
  %v586 = vpop.permute.xlu0 %585
  %587 = vrot.lane.b32.xlu0 %v392, 16
  %v588 = vpop.permute.xlu0 %587
  %vm589 = vcmask 130048
  %v590 = vsel %vm589, %v584, %v586
  %v591 = vsel %vm589, %v586, %v588
  %v592 = vsel %vm589, %v588, %v581
  %v597 = vsel %vm589, %v581, %v584
  %v598 = vlaneseq
  %v599 = vshrl.u32 %v598, 7
  %v600 = vsub.s32 0, %v599
  %v601 = vrot.slane %v394, %v600
  %v602 = vlaneseq
  %v603 = vshrl.u32 %v602, 7
  %v604 = vsub.s32 4, %v603
  %v605 = vrot.slane %v394, %v604
  %v606 = vlaneseq
  %v607 = vshrl.u32 %v606, 7
  %v608 = vsub.s32 0, %v607
  %v609 = vrot.slane %v395, %v608
  %v610 = vlaneseq
  %v611 = vshrl.u32 %v610, 7
  %v612 = vsub.s32 4, %v611
  %v613 = vrot.slane %v395, %v612
  %v618 = vlaneseq
  %v619 = vshrl.u32 %v618, 7
  %v620 = vsub.s32 0, %v619
  %v621 = vrot.slane %v601, %v620
  %v622 = vlaneseq
  %v623 = vshrl.u32 %v622, 7
  %v624 = vsub.s32 0, %v623
  %v625 = vrot.slane %v605, %v624
  %v626 = vlaneseq
  %v627 = vshrl.u32 %v626, 7
  %v628 = vsub.s32 0, %v627
  %v629 = vrot.slane %v609, %v628
  %v630 = vlaneseq
  %v631 = vshrl.u32 %v630, 7
  %v632 = vsub.s32 0, %v631
  %v633 = vrot.slane %v613, %v632
  %v634 = vmul.f32 %v597, %v621
  %v635 = vmul.f32 %v590, %v625
  %v636 = vmul.f32 %v591, %v629
  %v637 = vmul.f32 %v592, %v633
  %s638 = scalar_lea.vmem %s6, 4
  %v639 = vld [vmem:[%s638] sm:$0xf]
  %641 = vset.pattern.permute.xlu0 0
  %642 = vperm.xlu0 %641, %v639
  %v643 = vpop.permute.xlu0 %642
  %v645 = vlaneseq
  %v646 = vshrl.u32 %v645, 7
  %v647 = vsub.s32 0, %v646
  %v648 = vrot.slane %v634, %v647
  %v649 = vlaneseq
  %v650 = vshrl.u32 %v649, 7
  %v651 = vsub.s32 0, %v650
  %v652 = vrot.slane %v635, %v651
  %v653 = vlaneseq
  %v654 = vshrl.u32 %v653, 7
  %v655 = vsub.s32 0, %v654
  %v656 = vrot.slane %v636, %v655
  %v657 = vlaneseq
  %v658 = vshrl.u32 %v657, 7
  %v659 = vsub.s32 0, %v658
  %v660 = vrot.slane %v637, %v659
  %v661 = vmul.f32 %v643, %v648
  %v662 = vmul.f32 %v643, %v652
  %v663 = vmul.f32 %v643, %v656
  %v664 = vmul.f32 %v643, %v660
  %665 = vset.pattern.permute.xlu0 1
  %666 = vperm.xlu0 %665, %v639
  %v667 = vpop.permute.xlu0 %666
  %v669 = vlaneseq
  %v670 = vshrl.u32 %v669, 7
  %v671 = vsub.s32 1, %v670
  %v672 = vrot.slane %v634, %v671
  %v673 = vlaneseq
  %v674 = vshrl.u32 %v673, 7
  %v675 = vsub.s32 1, %v674
  %v676 = vrot.slane %v635, %v675
  %v677 = vlaneseq
  %v678 = vshrl.u32 %v677, 7
  %v679 = vsub.s32 1, %v678
  %v680 = vrot.slane %v636, %v679
  %v681 = vlaneseq
  %v682 = vshrl.u32 %v681, 7
  %v683 = vsub.s32 1, %v682
  %v684 = vrot.slane %v637, %v683
  %v685 = vmul.f32 %v667, %v672
  %v686 = vmul.f32 %v667, %v676
  %v687 = vmul.f32 %v667, %v680
  %v688 = vmul.f32 %v667, %v684
  %v689 = vadd.f32 %v661, %v685
  %v690 = vadd.f32 %v662, %v686
  %v691 = vadd.f32 %v663, %v687
  %v692 = vadd.f32 %v664, %v688
  %693 = vset.pattern.permute.xlu0 2
  %694 = vperm.xlu0 %693, %v639
  %v695 = vpop.permute.xlu0 %694
  %v697 = vlaneseq
  %v698 = vshrl.u32 %v697, 7
  %v699 = vsub.s32 2, %v698
  %v700 = vrot.slane %v634, %v699
  %v701 = vlaneseq
  %v702 = vshrl.u32 %v701, 7
  %v703 = vsub.s32 2, %v702
  %v704 = vrot.slane %v635, %v703
  %v705 = vlaneseq
  %v706 = vshrl.u32 %v705, 7
  %v707 = vsub.s32 2, %v706
  %v708 = vrot.slane %v636, %v707
  %v709 = vlaneseq
  %v710 = vshrl.u32 %v709, 7
  %v711 = vsub.s32 2, %v710
  %v712 = vrot.slane %v637, %v711
  %v713 = vmul.f32 %v695, %v700
  %v714 = vmul.f32 %v695, %v704
  %v715 = vmul.f32 %v695, %v708
  %v716 = vmul.f32 %v695, %v712
  %v717 = vadd.f32 %v689, %v713
  %v718 = vadd.f32 %v690, %v714
  %v719 = vadd.f32 %v691, %v715
  %v720 = vadd.f32 %v692, %v716
  %721 = vset.pattern.permute.xlu0 3
  %722 = vperm.xlu0 %721, %v639
  %v723 = vpop.permute.xlu0 %722
  %v725 = vlaneseq
  %v726 = vshrl.u32 %v725, 7
  %v727 = vsub.s32 3, %v726
  %v728 = vrot.slane %v634, %v727
  %v729 = vlaneseq
  %v730 = vshrl.u32 %v729, 7
  %v731 = vsub.s32 3, %v730
  %v732 = vrot.slane %v635, %v731
  %v733 = vlaneseq
  %v734 = vshrl.u32 %v733, 7
  %v735 = vsub.s32 3, %v734
  %v736 = vrot.slane %v636, %v735
  %v737 = vlaneseq
  %v738 = vshrl.u32 %v737, 7
  %v739 = vsub.s32 3, %v738
  %v740 = vrot.slane %v637, %v739
  %v741 = vmul.f32 %v723, %v728
  %v742 = vmul.f32 %v723, %v732
  %v743 = vmul.f32 %v723, %v736
  %v744 = vmul.f32 %v723, %v740
  %v745 = vadd.f32 %v717, %v741
  %v746 = vadd.f32 %v718, %v742
  %v747 = vadd.f32 %v719, %v743
  %v748 = vadd.f32 %v720, %v744
  %v749 = vadd.f32 %v576, %v745
  %v750 = vadd.f32 %v577, %v746
  %v751 = vadd.f32 %v578, %v747
  %v752 = vadd.f32 %v579, %v748
  %753 = vrot.lane.b32.xlu0 %v393, 15
  %v754 = vpop.permute.xlu0 %753
  %756 = vrot.lane.b32.xlu0 %v390, 15
  %v757 = vpop.permute.xlu0 %756
  %758 = vrot.lane.b32.xlu0 %v391, 15
  %v759 = vpop.permute.xlu0 %758
  %760 = vrot.lane.b32.xlu0 %v392, 15
  %v761 = vpop.permute.xlu0 %760
  %vm762 = vcmask 121856
  %v763 = vsel %vm762, %v757, %v759
  %v764 = vsel %vm762, %v759, %v761
  %v765 = vsel %vm762, %v761, %v754
  %v770 = vsel %vm762, %v754, %v757
  %v771 = vrot.slane %v394, 7
  %v772 = vrot.slane %v771, 4
  %v773 = vrot.slane %v395, 7
  %v774 = vrot.slane %v773, 4
  %v777 = vmul.f32 %v394, %v772
  %v778 = vmul.f32 %v395, %v774
  %v781 = vlaneseq
  %v782 = vshrl.u32 %v781, 7
  %v783 = vsub.s32 0, %v782
  %v784 = vrot.slane %v777, %v783
  %v785 = vlaneseq
  %v786 = vshrl.u32 %v785, 7
  %v787 = vsub.s32 4, %v786
  %v788 = vrot.slane %v777, %v787
  %v789 = vlaneseq
  %v790 = vshrl.u32 %v789, 7
  %v791 = vsub.s32 0, %v790
  %v792 = vrot.slane %v778, %v791
  %v793 = vlaneseq
  %v794 = vshrl.u32 %v793, 7
  %v795 = vsub.s32 4, %v794
  %v796 = vrot.slane %v778, %v795
  %v801 = vlaneseq
  %v802 = vshrl.u32 %v801, 7
  %v803 = vsub.s32 0, %v802
  %v804 = vrot.slane %v784, %v803
  %v805 = vlaneseq
  %v806 = vshrl.u32 %v805, 7
  %v807 = vsub.s32 0, %v806
  %v808 = vrot.slane %v788, %v807
  %v809 = vlaneseq
  %v810 = vshrl.u32 %v809, 7
  %v811 = vsub.s32 0, %v810
  %v812 = vrot.slane %v792, %v811
  %v813 = vlaneseq
  %v814 = vshrl.u32 %v813, 7
  %v815 = vsub.s32 0, %v814
  %v816 = vrot.slane %v796, %v815
  %v817 = vmul.f32 %v770, %v804
  %v818 = vmul.f32 %v763, %v808
  %v819 = vmul.f32 %v764, %v812
  %v820 = vmul.f32 %v765, %v816
  %s821 = scalar_lea.vmem %s6, 8
  %v822 = vld [vmem:[%s821] sm:$0xf]
  %824 = vset.pattern.permute.xlu0 0
  %825 = vperm.xlu0 %824, %v822
  %v826 = vpop.permute.xlu0 %825
  %v828 = vlaneseq
  %v829 = vshrl.u32 %v828, 7
  %v830 = vsub.s32 0, %v829
  %v831 = vrot.slane %v817, %v830
  %v832 = vlaneseq
  %v833 = vshrl.u32 %v832, 7
  %v834 = vsub.s32 0, %v833
  %v835 = vrot.slane %v818, %v834
  %v836 = vlaneseq
  %v837 = vshrl.u32 %v836, 7
  %v838 = vsub.s32 0, %v837
  %v839 = vrot.slane %v819, %v838
  %v840 = vlaneseq
  %v841 = vshrl.u32 %v840, 7
  %v842 = vsub.s32 0, %v841
  %v843 = vrot.slane %v820, %v842
  %v844 = vmul.f32 %v826, %v831
  %v845 = vmul.f32 %v826, %v835
  %v846 = vmul.f32 %v826, %v839
  %v847 = vmul.f32 %v826, %v843
  %848 = vset.pattern.permute.xlu0 1
  %849 = vperm.xlu0 %848, %v822
  %v850 = vpop.permute.xlu0 %849
  %v852 = vlaneseq
  %v853 = vshrl.u32 %v852, 7
  %v854 = vsub.s32 1, %v853
  %v855 = vrot.slane %v817, %v854
  %v856 = vlaneseq
  %v857 = vshrl.u32 %v856, 7
  %v858 = vsub.s32 1, %v857
  %v859 = vrot.slane %v818, %v858
  %v860 = vlaneseq
  %v861 = vshrl.u32 %v860, 7
  %v862 = vsub.s32 1, %v861
  %v863 = vrot.slane %v819, %v862
  %v864 = vlaneseq
  %v865 = vshrl.u32 %v864, 7
  %v866 = vsub.s32 1, %v865
  %v867 = vrot.slane %v820, %v866
  %v868 = vmul.f32 %v850, %v855
  %v869 = vmul.f32 %v850, %v859
  %v870 = vmul.f32 %v850, %v863
  %v871 = vmul.f32 %v850, %v867
  %v872 = vadd.f32 %v844, %v868
  %v873 = vadd.f32 %v845, %v869
  %v874 = vadd.f32 %v846, %v870
  %v875 = vadd.f32 %v847, %v871
  %876 = vset.pattern.permute.xlu0 2
  %877 = vperm.xlu0 %876, %v822
  %v878 = vpop.permute.xlu0 %877
  %v880 = vlaneseq
  %v881 = vshrl.u32 %v880, 7
  %v882 = vsub.s32 2, %v881
  %v883 = vrot.slane %v817, %v882
  %v884 = vlaneseq
  %v885 = vshrl.u32 %v884, 7
  %v886 = vsub.s32 2, %v885
  %v887 = vrot.slane %v818, %v886
  %v888 = vlaneseq
  %v889 = vshrl.u32 %v888, 7
  %v890 = vsub.s32 2, %v889
  %v891 = vrot.slane %v819, %v890
  %v892 = vlaneseq
  %v893 = vshrl.u32 %v892, 7
  %v894 = vsub.s32 2, %v893
  %v895 = vrot.slane %v820, %v894
  %v896 = vmul.f32 %v878, %v883
  %v897 = vmul.f32 %v878, %v887
  %v898 = vmul.f32 %v878, %v891
  %v899 = vmul.f32 %v878, %v895
  %v900 = vadd.f32 %v872, %v896
  %v901 = vadd.f32 %v873, %v897
  %v902 = vadd.f32 %v874, %v898
  %v903 = vadd.f32 %v875, %v899
  %904 = vset.pattern.permute.xlu0 3
  %905 = vperm.xlu0 %904, %v822
  %v906 = vpop.permute.xlu0 %905
  %v908 = vlaneseq
  %v909 = vshrl.u32 %v908, 7
  %v910 = vsub.s32 3, %v909
  %v911 = vrot.slane %v817, %v910
  %v912 = vlaneseq
  %v913 = vshrl.u32 %v912, 7
  %v914 = vsub.s32 3, %v913
  %v915 = vrot.slane %v818, %v914
  %v916 = vlaneseq
  %v917 = vshrl.u32 %v916, 7
  %v918 = vsub.s32 3, %v917
  %v919 = vrot.slane %v819, %v918
  %v920 = vlaneseq
  %v921 = vshrl.u32 %v920, 7
  %v922 = vsub.s32 3, %v921
  %v923 = vrot.slane %v820, %v922
  %v924 = vmul.f32 %v906, %v911
  %v925 = vmul.f32 %v906, %v915
  %v926 = vmul.f32 %v906, %v919
  %v927 = vmul.f32 %v906, %v923
  %v928 = vadd.f32 %v900, %v924
  %v929 = vadd.f32 %v901, %v925
  %v930 = vadd.f32 %v902, %v926
  %v931 = vadd.f32 %v903, %v927
  %v932 = vadd.f32 %v749, %v928
  %v933 = vadd.f32 %v750, %v929
  %v934 = vadd.f32 %v751, %v930
  %v935 = vadd.f32 %v752, %v931
  %936 = vrot.lane.b32.xlu0 %v393, 1
  %v937 = vpop.permute.xlu0 %936
  %939 = vrot.lane.b32.xlu0 %v390, 1
  %v940 = vpop.permute.xlu0 %939
  %941 = vrot.lane.b32.xlu0 %v391, 1
  %v942 = vpop.permute.xlu0 %941
  %943 = vrot.lane.b32.xlu0 %v392, 1
  %v944 = vpop.permute.xlu0 %943
  %vm945 = vcmask 7168
  %v946 = vsel %vm945, %v940, %v942
  %v947 = vsel %vm945, %v942, %v944
  %v948 = vsel %vm945, %v944, %v937
  %v953 = vsel %vm945, %v937, %v940
  %v954 = vlaneseq
  %v955 = vshrl.u32 %v954, 7
  %v956 = vsub.s32 2, %v955
  %v957 = vrot.slane %v394, %v956
  %v958 = vlaneseq
  %v959 = vshrl.u32 %v958, 7
  %v960 = vsub.s32 6, %v959
  %v961 = vrot.slane %v394, %v960
  %v962 = vlaneseq
  %v963 = vshrl.u32 %v962, 7
  %v964 = vsub.s32 2, %v963
  %v965 = vrot.slane %v395, %v964
  %v966 = vlaneseq
  %v967 = vshrl.u32 %v966, 7
  %v968 = vsub.s32 6, %v967
  %v969 = vrot.slane %v395, %v968
  %v974 = vlaneseq
  %v975 = vshrl.u32 %v974, 7
  %v976 = vsub.s32 2, %v975
  %v977 = vrot.slane %v957, %v976
  %v978 = vlaneseq
  %v979 = vshrl.u32 %v978, 7
  %v980 = vsub.s32 2, %v979
  %v981 = vrot.slane %v961, %v980
  %v982 = vlaneseq
  %v983 = vshrl.u32 %v982, 7
  %v984 = vsub.s32 2, %v983
  %v985 = vrot.slane %v965, %v984
  %v986 = vlaneseq
  %v987 = vshrl.u32 %v986, 7
  %v988 = vsub.s32 2, %v987
  %v989 = vrot.slane %v969, %v988
  %v990 = vmul.f32 %v953, %v977
  %v991 = vmul.f32 %v946, %v981
  %v992 = vmul.f32 %v947, %v985
  %v993 = vmul.f32 %v948, %v989
  %s994 = scalar_lea.vmem %s6, 12
  %v995 = vld [vmem:[%s994] sm:$0xf]
  %997 = vset.pattern.permute.xlu0 0
  %998 = vperm.xlu0 %997, %v995
  %v999 = vpop.permute.xlu0 %998
  %v1001 = vlaneseq
  %v1002 = vshrl.u32 %v1001, 7
  %v1003 = vsub.s32 0, %v1002
  %v1004 = vrot.slane %v990, %v1003
  %v1005 = vlaneseq
  %v1006 = vshrl.u32 %v1005, 7
  %v1007 = vsub.s32 0, %v1006
  %v1008 = vrot.slane %v991, %v1007
  %v1009 = vlaneseq
  %v1010 = vshrl.u32 %v1009, 7
  %v1011 = vsub.s32 0, %v1010
  %v1012 = vrot.slane %v992, %v1011
  %v1013 = vlaneseq
  %v1014 = vshrl.u32 %v1013, 7
  %v1015 = vsub.s32 0, %v1014
  %v1016 = vrot.slane %v993, %v1015
  %v1017 = vmul.f32 %v999, %v1004
  %v1018 = vmul.f32 %v999, %v1008
  %v1019 = vmul.f32 %v999, %v1012
  %v1020 = vmul.f32 %v999, %v1016
  %1021 = vset.pattern.permute.xlu0 1
  %1022 = vperm.xlu0 %1021, %v995
  %v1023 = vpop.permute.xlu0 %1022
  %v1025 = vlaneseq
  %v1026 = vshrl.u32 %v1025, 7
  %v1027 = vsub.s32 1, %v1026
  %v1028 = vrot.slane %v990, %v1027
  %v1029 = vlaneseq
  %v1030 = vshrl.u32 %v1029, 7
  %v1031 = vsub.s32 1, %v1030
  %v1032 = vrot.slane %v991, %v1031
  %v1033 = vlaneseq
  %v1034 = vshrl.u32 %v1033, 7
  %v1035 = vsub.s32 1, %v1034
  %v1036 = vrot.slane %v992, %v1035
  %v1037 = vlaneseq
  %v1038 = vshrl.u32 %v1037, 7
  %v1039 = vsub.s32 1, %v1038
  %v1040 = vrot.slane %v993, %v1039
  %v1041 = vmul.f32 %v1023, %v1028
  %v1042 = vmul.f32 %v1023, %v1032
  %v1043 = vmul.f32 %v1023, %v1036
  %v1044 = vmul.f32 %v1023, %v1040
  %v1045 = vadd.f32 %v1017, %v1041
  %v1046 = vadd.f32 %v1018, %v1042
  %v1047 = vadd.f32 %v1019, %v1043
  %v1048 = vadd.f32 %v1020, %v1044
  %1049 = vset.pattern.permute.xlu0 2
  %1050 = vperm.xlu0 %1049, %v995
  %v1051 = vpop.permute.xlu0 %1050
  %v1053 = vlaneseq
  %v1054 = vshrl.u32 %v1053, 7
  %v1055 = vsub.s32 2, %v1054
  %v1056 = vrot.slane %v990, %v1055
  %v1057 = vlaneseq
  %v1058 = vshrl.u32 %v1057, 7
  %v1059 = vsub.s32 2, %v1058
  %v1060 = vrot.slane %v991, %v1059
  %v1061 = vlaneseq
  %v1062 = vshrl.u32 %v1061, 7
  %v1063 = vsub.s32 2, %v1062
  %v1064 = vrot.slane %v992, %v1063
  %v1065 = vlaneseq
  %v1066 = vshrl.u32 %v1065, 7
  %v1067 = vsub.s32 2, %v1066
  %v1068 = vrot.slane %v993, %v1067
  %v1069 = vmul.f32 %v1051, %v1056
  %v1070 = vmul.f32 %v1051, %v1060
  %v1071 = vmul.f32 %v1051, %v1064
  %v1072 = vmul.f32 %v1051, %v1068
  %v1073 = vadd.f32 %v1045, %v1069
  %v1074 = vadd.f32 %v1046, %v1070
  %v1075 = vadd.f32 %v1047, %v1071
  %v1076 = vadd.f32 %v1048, %v1072
  %1077 = vset.pattern.permute.xlu0 3
  %1078 = vperm.xlu0 %1077, %v995
  %v1079 = vpop.permute.xlu0 %1078
  %v1081 = vlaneseq
  %v1082 = vshrl.u32 %v1081, 7
  %v1083 = vsub.s32 3, %v1082
  %v1084 = vrot.slane %v990, %v1083
  %v1085 = vlaneseq
  %v1086 = vshrl.u32 %v1085, 7
  %v1087 = vsub.s32 3, %v1086
  %v1088 = vrot.slane %v991, %v1087
  %v1089 = vlaneseq
  %v1090 = vshrl.u32 %v1089, 7
  %v1091 = vsub.s32 3, %v1090
  %v1092 = vrot.slane %v992, %v1091
  %v1093 = vlaneseq
  %v1094 = vshrl.u32 %v1093, 7
  %v1095 = vsub.s32 3, %v1094
  %v1096 = vrot.slane %v993, %v1095
  %v1097 = vmul.f32 %v1079, %v1084
  %v1098 = vmul.f32 %v1079, %v1088
  %v1099 = vmul.f32 %v1079, %v1092
  %v1100 = vmul.f32 %v1079, %v1096
  %v1101 = vadd.f32 %v1073, %v1097
  %v1102 = vadd.f32 %v1074, %v1098
  %v1103 = vadd.f32 %v1075, %v1099
  %v1104 = vadd.f32 %v1076, %v1100
  %v1105 = vadd.f32 %v932, %v1101
  %v1106 = vadd.f32 %v933, %v1102
  %v1107 = vadd.f32 %v934, %v1103
  %v1108 = vadd.f32 %v935, %v1104
  %s1109 = scalar_lea.vmem %s6, 16
  %v1110 = vld [vmem:[%s1109] sm:$0xf]
  %1112 = vset.pattern.permute.xlu0 0
  %1113 = vperm.xlu0 %1112, %v1110
  %v1114 = vpop.permute.xlu0 %1113
  %v1116 = vlaneseq
  %v1117 = vshrl.u32 %v1116, 7
  %v1118 = vsub.s32 0, %v1117
  %v1119 = vrot.slane %v390, %v1118
  %v1120 = vlaneseq
  %v1121 = vshrl.u32 %v1120, 7
  %v1122 = vsub.s32 0, %v1121
  %v1123 = vrot.slane %v391, %v1122
  %v1124 = vlaneseq
  %v1125 = vshrl.u32 %v1124, 7
  %v1126 = vsub.s32 0, %v1125
  %v1127 = vrot.slane %v392, %v1126
  %v1128 = vlaneseq
  %v1129 = vshrl.u32 %v1128, 7
  %v1130 = vsub.s32 0, %v1129
  %v1131 = vrot.slane %v393, %v1130
  %v1132 = vmul.f32 %v1114, %v1119
  %v1133 = vmul.f32 %v1114, %v1123
  %v1134 = vmul.f32 %v1114, %v1127
  %v1135 = vmul.f32 %v1114, %v1131
  %1136 = vset.pattern.permute.xlu0 1
  %1137 = vperm.xlu0 %1136, %v1110
  %v1138 = vpop.permute.xlu0 %1137
  %v1140 = vlaneseq
  %v1141 = vshrl.u32 %v1140, 7
  %v1142 = vsub.s32 1, %v1141
  %v1143 = vrot.slane %v390, %v1142
  %v1144 = vlaneseq
  %v1145 = vshrl.u32 %v1144, 7
  %v1146 = vsub.s32 1, %v1145
  %v1147 = vrot.slane %v391, %v1146
  %v1148 = vlaneseq
  %v1149 = vshrl.u32 %v1148, 7
  %v1150 = vsub.s32 1, %v1149
  %v1151 = vrot.slane %v392, %v1150
  %v1152 = vlaneseq
  %v1153 = vshrl.u32 %v1152, 7
  %v1154 = vsub.s32 1, %v1153
  %v1155 = vrot.slane %v393, %v1154
  %v1156 = vmul.f32 %v1138, %v1143
  %v1157 = vmul.f32 %v1138, %v1147
  %v1158 = vmul.f32 %v1138, %v1151
  %v1159 = vmul.f32 %v1138, %v1155
  %v1160 = vadd.f32 %v1132, %v1156
  %v1161 = vadd.f32 %v1133, %v1157
  %v1162 = vadd.f32 %v1134, %v1158
  %v1163 = vadd.f32 %v1135, %v1159
  %1164 = vset.pattern.permute.xlu0 2
  %1165 = vperm.xlu0 %1164, %v1110
  %v1166 = vpop.permute.xlu0 %1165
  %v1168 = vlaneseq
  %v1169 = vshrl.u32 %v1168, 7
  %v1170 = vsub.s32 2, %v1169
  %v1171 = vrot.slane %v390, %v1170
  %v1172 = vlaneseq
  %v1173 = vshrl.u32 %v1172, 7
  %v1174 = vsub.s32 2, %v1173
  %v1175 = vrot.slane %v391, %v1174
  %v1176 = vlaneseq
  %v1177 = vshrl.u32 %v1176, 7
  %v1178 = vsub.s32 2, %v1177
  %v1179 = vrot.slane %v392, %v1178
  %v1180 = vlaneseq
  %v1181 = vshrl.u32 %v1180, 7
  %v1182 = vsub.s32 2, %v1181
  %v1183 = vrot.slane %v393, %v1182
  %v1184 = vmul.f32 %v1166, %v1171
  %v1185 = vmul.f32 %v1166, %v1175
  %v1186 = vmul.f32 %v1166, %v1179
  %v1187 = vmul.f32 %v1166, %v1183
  %v1188 = vadd.f32 %v1160, %v1184
  %v1189 = vadd.f32 %v1161, %v1185
  %v1190 = vadd.f32 %v1162, %v1186
  %v1191 = vadd.f32 %v1163, %v1187
  %1192 = vset.pattern.permute.xlu0 3
  %1193 = vperm.xlu0 %1192, %v1110
  %v1194 = vpop.permute.xlu0 %1193
  %v1196 = vlaneseq
  %v1197 = vshrl.u32 %v1196, 7
  %v1198 = vsub.s32 3, %v1197
  %v1199 = vrot.slane %v390, %v1198
  %v1200 = vlaneseq
  %v1201 = vshrl.u32 %v1200, 7
  %v1202 = vsub.s32 3, %v1201
  %v1203 = vrot.slane %v391, %v1202
  %v1204 = vlaneseq
  %v1205 = vshrl.u32 %v1204, 7
  %v1206 = vsub.s32 3, %v1205
  %v1207 = vrot.slane %v392, %v1206
  %v1208 = vlaneseq
  %v1209 = vshrl.u32 %v1208, 7
  %v1210 = vsub.s32 3, %v1209
  %v1211 = vrot.slane %v393, %v1210
  %v1212 = vmul.f32 %v1194, %v1199
  %v1213 = vmul.f32 %v1194, %v1203
  %v1214 = vmul.f32 %v1194, %v1207
  %v1215 = vmul.f32 %v1194, %v1211
  %v1216 = vadd.f32 %v1188, %v1212
  %v1217 = vadd.f32 %v1189, %v1213
  %v1218 = vadd.f32 %v1190, %v1214
  %v1219 = vadd.f32 %v1191, %v1215
  %v1220 = vadd.f32 %v1105, %v1216
  %v1221 = vadd.f32 %v1106, %v1217
  %v1222 = vadd.f32 %v1107, %v1218
  %v1223 = vadd.f32 %v1108, %v1219
  %1224 = vrot.lane.b32.xlu0 %v390, 127
  %v1225 = vpop.permute.xlu0 %1224
  %1226 = vrot.lane.b32.xlu0 %v391, 127
  %v1227 = vpop.permute.xlu0 %1226
  %1228 = vrot.lane.b32.xlu0 %v392, 127
  %v1229 = vpop.permute.xlu0 %1228
  %1230 = vrot.lane.b32.xlu0 %v393, 127
  %v1231 = vpop.permute.xlu0 %1230
  %vm1232 = vcmask 1039360
  %v1233 = vsel %vm1232, %v1225, %v1227
  %v1234 = vsel %vm1232, %v1227, %v1229
  %v1235 = vsel %vm1232, %v1229, %v1231
  %v1241 = vsel %vm1232, %v1231, %v1225
  %v1242 = vlaneseq
  %v1243 = vshrl.u32 %v1242, 7
  %v1244 = vsub.s32 3, %v1243
  %v1245 = vrot.slane %v394, %v1244
  %v1246 = vlaneseq
  %v1247 = vshrl.u32 %v1246, 7
  %v1248 = vsub.s32 7, %v1247
  %v1249 = vrot.slane %v394, %v1248
  %v1250 = vlaneseq
  %v1251 = vshrl.u32 %v1250, 7
  %v1252 = vsub.s32 3, %v1251
  %v1253 = vrot.slane %v395, %v1252
  %v1254 = vlaneseq
  %v1255 = vshrl.u32 %v1254, 7
  %v1256 = vsub.s32 7, %v1255
  %v1257 = vrot.slane %v395, %v1256
  %v1262 = vlaneseq
  %v1263 = vshrl.u32 %v1262, 7
  %v1264 = vsub.s32 3, %v1263
  %v1265 = vrot.slane %v1245, %v1264
  %v1266 = vlaneseq
  %v1267 = vshrl.u32 %v1266, 7
  %v1268 = vsub.s32 3, %v1267
  %v1269 = vrot.slane %v1249, %v1268
  %v1270 = vlaneseq
  %v1271 = vshrl.u32 %v1270, 7
  %v1272 = vsub.s32 3, %v1271
  %v1273 = vrot.slane %v1253, %v1272
  %v1274 = vlaneseq
  %v1275 = vshrl.u32 %v1274, 7
  %v1276 = vsub.s32 3, %v1275
  %v1277 = vrot.slane %v1257, %v1276
  %v1278 = vmul.f32 %v1233, %v1265
  %v1279 = vmul.f32 %v1234, %v1269
  %v1280 = vmul.f32 %v1235, %v1273
  %v1281 = vmul.f32 %v1241, %v1277
  %s1282 = scalar_lea.vmem %s6, 20
  %v1283 = vld [vmem:[%s1282] sm:$0xf]
  %1285 = vset.pattern.permute.xlu0 0
  %1286 = vperm.xlu0 %1285, %v1283
  %v1287 = vpop.permute.xlu0 %1286
  %v1289 = vlaneseq
  %v1290 = vshrl.u32 %v1289, 7
  %v1291 = vsub.s32 0, %v1290
  %v1292 = vrot.slane %v1278, %v1291
  %v1293 = vlaneseq
  %v1294 = vshrl.u32 %v1293, 7
  %v1295 = vsub.s32 0, %v1294
  %v1296 = vrot.slane %v1279, %v1295
  %v1297 = vlaneseq
  %v1298 = vshrl.u32 %v1297, 7
  %v1299 = vsub.s32 0, %v1298
  %v1300 = vrot.slane %v1280, %v1299
  %v1301 = vlaneseq
  %v1302 = vshrl.u32 %v1301, 7
  %v1303 = vsub.s32 0, %v1302
  %v1304 = vrot.slane %v1281, %v1303
  %v1305 = vmul.f32 %v1287, %v1292
  %v1306 = vmul.f32 %v1287, %v1296
  %v1307 = vmul.f32 %v1287, %v1300
  %v1308 = vmul.f32 %v1287, %v1304
  %1309 = vset.pattern.permute.xlu0 1
  %1310 = vperm.xlu0 %1309, %v1283
  %v1311 = vpop.permute.xlu0 %1310
  %v1313 = vlaneseq
  %v1314 = vshrl.u32 %v1313, 7
  %v1315 = vsub.s32 1, %v1314
  %v1316 = vrot.slane %v1278, %v1315
  %v1317 = vlaneseq
  %v1318 = vshrl.u32 %v1317, 7
  %v1319 = vsub.s32 1, %v1318
  %v1320 = vrot.slane %v1279, %v1319
  %v1321 = vlaneseq
  %v1322 = vshrl.u32 %v1321, 7
  %v1323 = vsub.s32 1, %v1322
  %v1324 = vrot.slane %v1280, %v1323
  %v1325 = vlaneseq
  %v1326 = vshrl.u32 %v1325, 7
  %v1327 = vsub.s32 1, %v1326
  %v1328 = vrot.slane %v1281, %v1327
  %v1329 = vmul.f32 %v1311, %v1316
  %v1330 = vmul.f32 %v1311, %v1320
  %v1331 = vmul.f32 %v1311, %v1324
  %v1332 = vmul.f32 %v1311, %v1328
  %v1333 = vadd.f32 %v1305, %v1329
  %v1334 = vadd.f32 %v1306, %v1330
  %v1335 = vadd.f32 %v1307, %v1331
  %v1336 = vadd.f32 %v1308, %v1332
  %1337 = vset.pattern.permute.xlu0 2
  %1338 = vperm.xlu0 %1337, %v1283
  %v1339 = vpop.permute.xlu0 %1338
  %v1341 = vlaneseq
  %v1342 = vshrl.u32 %v1341, 7
  %v1343 = vsub.s32 2, %v1342
  %v1344 = vrot.slane %v1278, %v1343
  %v1345 = vlaneseq
  %v1346 = vshrl.u32 %v1345, 7
  %v1347 = vsub.s32 2, %v1346
  %v1348 = vrot.slane %v1279, %v1347
  %v1349 = vlaneseq
  %v1350 = vshrl.u32 %v1349, 7
  %v1351 = vsub.s32 2, %v1350
  %v1352 = vrot.slane %v1280, %v1351
  %v1353 = vlaneseq
  %v1354 = vshrl.u32 %v1353, 7
  %v1355 = vsub.s32 2, %v1354
  %v1356 = vrot.slane %v1281, %v1355
  %v1357 = vmul.f32 %v1339, %v1344
  %v1358 = vmul.f32 %v1339, %v1348
  %v1359 = vmul.f32 %v1339, %v1352
  %v1360 = vmul.f32 %v1339, %v1356
  %v1361 = vadd.f32 %v1333, %v1357
  %v1362 = vadd.f32 %v1334, %v1358
  %v1363 = vadd.f32 %v1335, %v1359
  %v1364 = vadd.f32 %v1336, %v1360
  %1365 = vset.pattern.permute.xlu0 3
  %1366 = vperm.xlu0 %1365, %v1283
  %v1367 = vpop.permute.xlu0 %1366
  %v1369 = vlaneseq
  %v1370 = vshrl.u32 %v1369, 7
  %v1371 = vsub.s32 3, %v1370
  %v1372 = vrot.slane %v1278, %v1371
  %v1373 = vlaneseq
  %v1374 = vshrl.u32 %v1373, 7
  %v1375 = vsub.s32 3, %v1374
  %v1376 = vrot.slane %v1279, %v1375
  %v1377 = vlaneseq
  %v1378 = vshrl.u32 %v1377, 7
  %v1379 = vsub.s32 3, %v1378
  %v1380 = vrot.slane %v1280, %v1379
  %v1381 = vlaneseq
  %v1382 = vshrl.u32 %v1381, 7
  %v1383 = vsub.s32 3, %v1382
  %v1384 = vrot.slane %v1281, %v1383
  %v1385 = vmul.f32 %v1367, %v1372
  %v1386 = vmul.f32 %v1367, %v1376
  %v1387 = vmul.f32 %v1367, %v1380
  %v1388 = vmul.f32 %v1367, %v1384
  %v1389 = vadd.f32 %v1361, %v1385
  %v1390 = vadd.f32 %v1362, %v1386
  %v1391 = vadd.f32 %v1363, %v1387
  %v1392 = vadd.f32 %v1364, %v1388
  %v1393 = vadd.f32 %v1220, %v1389
  %v1394 = vadd.f32 %v1221, %v1390
  %v1395 = vadd.f32 %v1222, %v1391
  %v1396 = vadd.f32 %v1223, %v1392
  %1397 = vrot.lane.b32.xlu0 %v390, 113
  %v1398 = vpop.permute.xlu0 %1397
  %1399 = vrot.lane.b32.xlu0 %v391, 113
  %v1400 = vpop.permute.xlu0 %1399
  %1401 = vrot.lane.b32.xlu0 %v392, 113
  %v1402 = vpop.permute.xlu0 %1401
  %1403 = vrot.lane.b32.xlu0 %v393, 113
  %v1404 = vpop.permute.xlu0 %1403
  %vm1405 = vcmask 924672
  %v1406 = vsel %vm1405, %v1398, %v1400
  %v1407 = vsel %vm1405, %v1400, %v1402
  %v1408 = vsel %vm1405, %v1402, %v1404
  %v1414 = vsel %vm1405, %v1404, %v1398
  %v1415 = vrot.slane %v394, 5
  %v1416 = vrot.slane %v1415, 4
  %v1417 = vrot.slane %v395, 5
  %v1418 = vrot.slane %v1417, 4
  %v1421 = vmul.f32 %v394, %v1416
  %v1422 = vmul.f32 %v395, %v1418
  %v1425 = vlaneseq
  %v1426 = vshrl.u32 %v1425, 7
  %v1427 = vsub.s32 1, %v1426
  %v1428 = vrot.slane %v1421, %v1427
  %v1429 = vlaneseq
  %v1430 = vshrl.u32 %v1429, 7
  %v1431 = vsub.s32 5, %v1430
  %v1432 = vrot.slane %v1421, %v1431
  %v1433 = vlaneseq
  %v1434 = vshrl.u32 %v1433, 7
  %v1435 = vsub.s32 1, %v1434
  %v1436 = vrot.slane %v1422, %v1435
  %v1437 = vlaneseq
  %v1438 = vshrl.u32 %v1437, 7
  %v1439 = vsub.s32 5, %v1438
  %v1440 = vrot.slane %v1422, %v1439
  %v1445 = vlaneseq
  %v1446 = vshrl.u32 %v1445, 7
  %v1447 = vsub.s32 1, %v1446
  %v1448 = vrot.slane %v1428, %v1447
  %v1449 = vlaneseq
  %v1450 = vshrl.u32 %v1449, 7
  %v1451 = vsub.s32 1, %v1450
  %v1452 = vrot.slane %v1432, %v1451
  %v1453 = vlaneseq
  %v1454 = vshrl.u32 %v1453, 7
  %v1455 = vsub.s32 1, %v1454
  %v1456 = vrot.slane %v1436, %v1455
  %v1457 = vlaneseq
  %v1458 = vshrl.u32 %v1457, 7
  %v1459 = vsub.s32 1, %v1458
  %v1460 = vrot.slane %v1440, %v1459
  %v1461 = vmul.f32 %v1406, %v1448
  %v1462 = vmul.f32 %v1407, %v1452
  %v1463 = vmul.f32 %v1408, %v1456
  %v1464 = vmul.f32 %v1414, %v1460
  %s1465 = scalar_lea.vmem %s6, 24
  %v1466 = vld [vmem:[%s1465] sm:$0xf]
  %1468 = vset.pattern.permute.xlu0 0
  %1469 = vperm.xlu0 %1468, %v1466
  %v1470 = vpop.permute.xlu0 %1469
  %v1472 = vlaneseq
  %v1473 = vshrl.u32 %v1472, 7
  %v1474 = vsub.s32 0, %v1473
  %v1475 = vrot.slane %v1461, %v1474
  %v1476 = vlaneseq
  %v1477 = vshrl.u32 %v1476, 7
  %v1478 = vsub.s32 0, %v1477
  %v1479 = vrot.slane %v1462, %v1478
  %v1480 = vlaneseq
  %v1481 = vshrl.u32 %v1480, 7
  %v1482 = vsub.s32 0, %v1481
  %v1483 = vrot.slane %v1463, %v1482
  %v1484 = vlaneseq
  %v1485 = vshrl.u32 %v1484, 7
  %v1486 = vsub.s32 0, %v1485
  %v1487 = vrot.slane %v1464, %v1486
  %v1488 = vmul.f32 %v1470, %v1475
  %v1489 = vmul.f32 %v1470, %v1479
  %v1490 = vmul.f32 %v1470, %v1483
  %v1491 = vmul.f32 %v1470, %v1487
  %1492 = vset.pattern.permute.xlu0 1
  %1493 = vperm.xlu0 %1492, %v1466
  %v1494 = vpop.permute.xlu0 %1493
  %v1496 = vlaneseq
  %v1497 = vshrl.u32 %v1496, 7
  %v1498 = vsub.s32 1, %v1497
  %v1499 = vrot.slane %v1461, %v1498
  %v1500 = vlaneseq
  %v1501 = vshrl.u32 %v1500, 7
  %v1502 = vsub.s32 1, %v1501
  %v1503 = vrot.slane %v1462, %v1502
  %v1504 = vlaneseq
  %v1505 = vshrl.u32 %v1504, 7
  %v1506 = vsub.s32 1, %v1505
  %v1507 = vrot.slane %v1463, %v1506
  %v1508 = vlaneseq
  %v1509 = vshrl.u32 %v1508, 7
  %v1510 = vsub.s32 1, %v1509
  %v1511 = vrot.slane %v1464, %v1510
  %v1512 = vmul.f32 %v1494, %v1499
  %v1513 = vmul.f32 %v1494, %v1503
  %v1514 = vmul.f32 %v1494, %v1507
  %v1515 = vmul.f32 %v1494, %v1511
  %v1516 = vadd.f32 %v1488, %v1512
  %v1517 = vadd.f32 %v1489, %v1513
  %v1518 = vadd.f32 %v1490, %v1514
  %v1519 = vadd.f32 %v1491, %v1515
  %1520 = vset.pattern.permute.xlu0 2
  %1521 = vperm.xlu0 %1520, %v1466
  %v1522 = vpop.permute.xlu0 %1521
  %v1524 = vlaneseq
  %v1525 = vshrl.u32 %v1524, 7
  %v1526 = vsub.s32 2, %v1525
  %v1527 = vrot.slane %v1461, %v1526
  %v1528 = vlaneseq
  %v1529 = vshrl.u32 %v1528, 7
  %v1530 = vsub.s32 2, %v1529
  %v1531 = vrot.slane %v1462, %v1530
  %v1532 = vlaneseq
  %v1533 = vshrl.u32 %v1532, 7
  %v1534 = vsub.s32 2, %v1533
  %v1535 = vrot.slane %v1463, %v1534
  %v1536 = vlaneseq
  %v1537 = vshrl.u32 %v1536, 7
  %v1538 = vsub.s32 2, %v1537
  %v1539 = vrot.slane %v1464, %v1538
  %v1540 = vmul.f32 %v1522, %v1527
  %v1541 = vmul.f32 %v1522, %v1531
  %v1542 = vmul.f32 %v1522, %v1535
  %v1543 = vmul.f32 %v1522, %v1539
  %v1544 = vadd.f32 %v1516, %v1540
  %v1545 = vadd.f32 %v1517, %v1541
  %v1546 = vadd.f32 %v1518, %v1542
  %v1547 = vadd.f32 %v1519, %v1543
  %1548 = vset.pattern.permute.xlu0 3
  %1549 = vperm.xlu0 %1548, %v1466
  %v1550 = vpop.permute.xlu0 %1549
  %v1552 = vlaneseq
  %v1553 = vshrl.u32 %v1552, 7
  %v1554 = vsub.s32 3, %v1553
  %v1555 = vrot.slane %v1461, %v1554
  %v1556 = vlaneseq
  %v1557 = vshrl.u32 %v1556, 7
  %v1558 = vsub.s32 3, %v1557
  %v1559 = vrot.slane %v1462, %v1558
  %v1560 = vlaneseq
  %v1561 = vshrl.u32 %v1560, 7
  %v1562 = vsub.s32 3, %v1561
  %v1563 = vrot.slane %v1463, %v1562
  %v1564 = vlaneseq
  %v1565 = vshrl.u32 %v1564, 7
  %v1566 = vsub.s32 3, %v1565
  %v1567 = vrot.slane %v1464, %v1566
  %v1568 = vmul.f32 %v1550, %v1555
  %v1569 = vmul.f32 %v1550, %v1559
  %v1570 = vmul.f32 %v1550, %v1563
  %v1571 = vmul.f32 %v1550, %v1567
  %v1572 = vadd.f32 %v1544, %v1568
  %v1573 = vadd.f32 %v1545, %v1569
  %v1574 = vadd.f32 %v1546, %v1570
  %v1575 = vadd.f32 %v1547, %v1571
  %v1576 = vadd.f32 %v1393, %v1572
  %v1577 = vadd.f32 %v1394, %v1573
  %v1578 = vadd.f32 %v1395, %v1574
  %v1579 = vadd.f32 %v1396, %v1575
  %1580 = vrot.lane.b32.xlu0 %v390, 112
  %v1581 = vpop.permute.xlu0 %1580
  %1582 = vrot.lane.b32.xlu0 %v391, 112
  %v1583 = vpop.permute.xlu0 %1582
  %1584 = vrot.lane.b32.xlu0 %v392, 112
  %v1585 = vpop.permute.xlu0 %1584
  %1586 = vrot.lane.b32.xlu0 %v393, 112
  %v1587 = vpop.permute.xlu0 %1586
  %vm1588 = vcmask 916480
  %v1589 = vsel %vm1588, %v1581, %v1583
  %v1590 = vsel %vm1588, %v1583, %v1585
  %v1591 = vsel %vm1588, %v1585, %v1587
  %v1597 = vsel %vm1588, %v1587, %v1581
  %v1598 = vlaneseq
  %v1599 = vshrl.u32 %v1598, 7
  %v1600 = vsub.s32 1, %v1599
  %v1601 = vrot.slane %v394, %v1600
  %v1602 = vlaneseq
  %v1603 = vshrl.u32 %v1602, 7
  %v1604 = vsub.s32 5, %v1603
  %v1605 = vrot.slane %v394, %v1604
  %v1606 = vlaneseq
  %v1607 = vshrl.u32 %v1606, 7
  %v1608 = vsub.s32 1, %v1607
  %v1609 = vrot.slane %v395, %v1608
  %v1610 = vlaneseq
  %v1611 = vshrl.u32 %v1610, 7
  %v1612 = vsub.s32 5, %v1611
  %v1613 = vrot.slane %v395, %v1612
  %v1618 = vlaneseq
  %v1619 = vshrl.u32 %v1618, 7
  %v1620 = vsub.s32 1, %v1619
  %v1621 = vrot.slane %v1601, %v1620
  %v1622 = vlaneseq
  %v1623 = vshrl.u32 %v1622, 7
  %v1624 = vsub.s32 1, %v1623
  %v1625 = vrot.slane %v1605, %v1624
  %v1626 = vlaneseq
  %v1627 = vshrl.u32 %v1626, 7
  %v1628 = vsub.s32 1, %v1627
  %v1629 = vrot.slane %v1609, %v1628
  %v1630 = vlaneseq
  %v1631 = vshrl.u32 %v1630, 7
  %v1632 = vsub.s32 1, %v1631
  %v1633 = vrot.slane %v1613, %v1632
  %v1634 = vmul.f32 %v1589, %v1621
  %v1635 = vmul.f32 %v1590, %v1625
  %v1636 = vmul.f32 %v1591, %v1629
  %v1637 = vmul.f32 %v1597, %v1633
  %s1638 = scalar_lea.vmem %s6, 28
  %v1639 = vld [vmem:[%s1638] sm:$0xf]
  %1641 = vset.pattern.permute.xlu0 0
  %1642 = vperm.xlu0 %1641, %v1639
  %v1643 = vpop.permute.xlu0 %1642
  %v1645 = vlaneseq
  %v1646 = vshrl.u32 %v1645, 7
  %v1647 = vsub.s32 0, %v1646
  %v1648 = vrot.slane %v1634, %v1647
  %v1649 = vlaneseq
  %v1650 = vshrl.u32 %v1649, 7
  %v1651 = vsub.s32 0, %v1650
  %v1652 = vrot.slane %v1635, %v1651
  %v1653 = vlaneseq
  %v1654 = vshrl.u32 %v1653, 7
  %v1655 = vsub.s32 0, %v1654
  %v1656 = vrot.slane %v1636, %v1655
  %v1657 = vlaneseq
  %v1658 = vshrl.u32 %v1657, 7
  %v1659 = vsub.s32 0, %v1658
  %v1660 = vrot.slane %v1637, %v1659
  %v1661 = vmul.f32 %v1643, %v1648
  %v1662 = vmul.f32 %v1643, %v1652
  %v1663 = vmul.f32 %v1643, %v1656
  %v1664 = vmul.f32 %v1643, %v1660
  %1665 = vset.pattern.permute.xlu0 1
  %1666 = vperm.xlu0 %1665, %v1639
  %v1667 = vpop.permute.xlu0 %1666
  %v1669 = vlaneseq
  %v1670 = vshrl.u32 %v1669, 7
  %v1671 = vsub.s32 1, %v1670
  %v1672 = vrot.slane %v1634, %v1671
  %v1673 = vlaneseq
  %v1674 = vshrl.u32 %v1673, 7
  %v1675 = vsub.s32 1, %v1674
  %v1676 = vrot.slane %v1635, %v1675
  %v1677 = vlaneseq
  %v1678 = vshrl.u32 %v1677, 7
  %v1679 = vsub.s32 1, %v1678
  %v1680 = vrot.slane %v1636, %v1679
  %v1681 = vlaneseq
  %v1682 = vshrl.u32 %v1681, 7
  %v1683 = vsub.s32 1, %v1682
  %v1684 = vrot.slane %v1637, %v1683
  %v1685 = vmul.f32 %v1667, %v1672
  %v1686 = vmul.f32 %v1667, %v1676
  %v1687 = vmul.f32 %v1667, %v1680
  %v1688 = vmul.f32 %v1667, %v1684
  %v1689 = vadd.f32 %v1661, %v1685
  %v1690 = vadd.f32 %v1662, %v1686
  %v1691 = vadd.f32 %v1663, %v1687
  %v1692 = vadd.f32 %v1664, %v1688
  %1693 = vset.pattern.permute.xlu0 2
  %1694 = vperm.xlu0 %1693, %v1639
  %v1695 = vpop.permute.xlu0 %1694
  %v1697 = vlaneseq
  %v1698 = vshrl.u32 %v1697, 7
  %v1699 = vsub.s32 2, %v1698
  %v1700 = vrot.slane %v1634, %v1699
  %v1701 = vlaneseq
  %v1702 = vshrl.u32 %v1701, 7
  %v1703 = vsub.s32 2, %v1702
  %v1704 = vrot.slane %v1635, %v1703
  %v1705 = vlaneseq
  %v1706 = vshrl.u32 %v1705, 7
  %v1707 = vsub.s32 2, %v1706
  %v1708 = vrot.slane %v1636, %v1707
  %v1709 = vlaneseq
  %v1710 = vshrl.u32 %v1709, 7
  %v1711 = vsub.s32 2, %v1710
  %v1712 = vrot.slane %v1637, %v1711
  %v1713 = vmul.f32 %v1695, %v1700
  %v1714 = vmul.f32 %v1695, %v1704
  %v1715 = vmul.f32 %v1695, %v1708
  %v1716 = vmul.f32 %v1695, %v1712
  %v1717 = vadd.f32 %v1689, %v1713
  %v1718 = vadd.f32 %v1690, %v1714
  %v1719 = vadd.f32 %v1691, %v1715
  %v1720 = vadd.f32 %v1692, %v1716
  %1721 = vset.pattern.permute.xlu0 3
  %1722 = vperm.xlu0 %1721, %v1639
  %v1723 = vpop.permute.xlu0 %1722
  %v1725 = vlaneseq
  %v1726 = vshrl.u32 %v1725, 7
  %v1727 = vsub.s32 3, %v1726
  %v1728 = vrot.slane %v1634, %v1727
  %v1729 = vlaneseq
  %v1730 = vshrl.u32 %v1729, 7
  %v1731 = vsub.s32 3, %v1730
  %v1732 = vrot.slane %v1635, %v1731
  %v1733 = vlaneseq
  %v1734 = vshrl.u32 %v1733, 7
  %v1735 = vsub.s32 3, %v1734
  %v1736 = vrot.slane %v1636, %v1735
  %v1737 = vlaneseq
  %v1738 = vshrl.u32 %v1737, 7
  %v1739 = vsub.s32 3, %v1738
  %v1740 = vrot.slane %v1637, %v1739
  %v1741 = vmul.f32 %v1723, %v1728
  %v1742 = vmul.f32 %v1723, %v1732
  %v1743 = vmul.f32 %v1723, %v1736
  %v1744 = vmul.f32 %v1723, %v1740
  %v1745 = vadd.f32 %v1717, %v1741
  %v1746 = vadd.f32 %v1718, %v1742
  %v1747 = vadd.f32 %v1719, %v1743
  %v1748 = vadd.f32 %v1720, %v1744
  %v1749 = vadd.f32 %v1576, %v1745
  %v1750 = vadd.f32 %v1577, %v1746
  %v1751 = vadd.f32 %v1578, %v1747
  %v1752 = vadd.f32 %v1579, %v1748
  %1753 = vrot.lane.b32.xlu0 %v390, 111
  %v1754 = vpop.permute.xlu0 %1753
  %1755 = vrot.lane.b32.xlu0 %v391, 111
  %v1756 = vpop.permute.xlu0 %1755
  %1757 = vrot.lane.b32.xlu0 %v392, 111
  %v1758 = vpop.permute.xlu0 %1757
  %1759 = vrot.lane.b32.xlu0 %v393, 111
  %v1760 = vpop.permute.xlu0 %1759
  %vm1761 = vcmask 908288
  %v1762 = vsel %vm1761, %v1754, %v1756
  %v1763 = vsel %vm1761, %v1756, %v1758
  %v1764 = vsel %vm1761, %v1758, %v1760
  %v1770 = vsel %vm1761, %v1760, %v1754
  %v1771 = vlaneseq
  %v1772 = vshrl.u32 %v1771, 7
  %v1773 = vsub.s32 1, %v1772
  %v1774 = vrot.slane %v426, %v1773
  %v1775 = vlaneseq
  %v1776 = vshrl.u32 %v1775, 7
  %v1777 = vsub.s32 5, %v1776
  %v1778 = vrot.slane %v426, %v1777
  %v1779 = vlaneseq
  %v1780 = vshrl.u32 %v1779, 7
  %v1781 = vsub.s32 1, %v1780
  %v1782 = vrot.slane %v427, %v1781
  %v1783 = vlaneseq
  %v1784 = vshrl.u32 %v1783, 7
  %v1785 = vsub.s32 5, %v1784
  %v1786 = vrot.slane %v427, %v1785
  %v1791 = vlaneseq
  %v1792 = vshrl.u32 %v1791, 7
  %v1793 = vsub.s32 1, %v1792
  %v1794 = vrot.slane %v1774, %v1793
  %v1795 = vlaneseq
  %v1796 = vshrl.u32 %v1795, 7
  %v1797 = vsub.s32 1, %v1796
  %v1798 = vrot.slane %v1778, %v1797
  %v1799 = vlaneseq
  %v1800 = vshrl.u32 %v1799, 7
  %v1801 = vsub.s32 1, %v1800
  %v1802 = vrot.slane %v1782, %v1801
  %v1803 = vlaneseq
  %v1804 = vshrl.u32 %v1803, 7
  %v1805 = vsub.s32 1, %v1804
  %v1806 = vrot.slane %v1786, %v1805
  %v1807 = vmul.f32 %v1762, %v1794
  %v1808 = vmul.f32 %v1763, %v1798
  %v1809 = vmul.f32 %v1764, %v1802
  %v1810 = vmul.f32 %v1770, %v1806
  %s1811 = scalar_lea.vmem %s6, 32
  %v1812 = vld [vmem:[%s1811] sm:$0xf]
  %1814 = vset.pattern.permute.xlu0 0
  %1815 = vperm.xlu0 %1814, %v1812
  %v1816 = vpop.permute.xlu0 %1815
  %v1818 = vlaneseq
  %v1819 = vshrl.u32 %v1818, 7
  %v1820 = vsub.s32 0, %v1819
  %v1821 = vrot.slane %v1807, %v1820
  %v1822 = vlaneseq
  %v1823 = vshrl.u32 %v1822, 7
  %v1824 = vsub.s32 0, %v1823
  %v1825 = vrot.slane %v1808, %v1824
  %v1826 = vlaneseq
  %v1827 = vshrl.u32 %v1826, 7
  %v1828 = vsub.s32 0, %v1827
  %v1829 = vrot.slane %v1809, %v1828
  %v1830 = vlaneseq
  %v1831 = vshrl.u32 %v1830, 7
  %v1832 = vsub.s32 0, %v1831
  %v1833 = vrot.slane %v1810, %v1832
  %v1834 = vmul.f32 %v1816, %v1821
  %v1835 = vmul.f32 %v1816, %v1825
  %v1836 = vmul.f32 %v1816, %v1829
  %v1837 = vmul.f32 %v1816, %v1833
  %1838 = vset.pattern.permute.xlu0 1
  %1839 = vperm.xlu0 %1838, %v1812
  %v1840 = vpop.permute.xlu0 %1839
  %v1842 = vlaneseq
  %v1843 = vshrl.u32 %v1842, 7
  %v1844 = vsub.s32 1, %v1843
  %v1845 = vrot.slane %v1807, %v1844
  %v1846 = vlaneseq
  %v1847 = vshrl.u32 %v1846, 7
  %v1848 = vsub.s32 1, %v1847
  %v1849 = vrot.slane %v1808, %v1848
  %v1850 = vlaneseq
  %v1851 = vshrl.u32 %v1850, 7
  %v1852 = vsub.s32 1, %v1851
  %v1853 = vrot.slane %v1809, %v1852
  %v1854 = vlaneseq
  %v1855 = vshrl.u32 %v1854, 7
  %v1856 = vsub.s32 1, %v1855
  %v1857 = vrot.slane %v1810, %v1856
  %v1858 = vmul.f32 %v1840, %v1845
  %v1859 = vmul.f32 %v1840, %v1849
  %v1860 = vmul.f32 %v1840, %v1853
  %v1861 = vmul.f32 %v1840, %v1857
  %v1862 = vadd.f32 %v1834, %v1858
  %v1863 = vadd.f32 %v1835, %v1859
  %v1864 = vadd.f32 %v1836, %v1860
  %v1865 = vadd.f32 %v1837, %v1861
  %1866 = vset.pattern.permute.xlu0 2
  %1867 = vperm.xlu0 %1866, %v1812
  %v1868 = vpop.permute.xlu0 %1867
  %v1870 = vlaneseq
  %v1871 = vshrl.u32 %v1870, 7
  %v1872 = vsub.s32 2, %v1871
  %v1873 = vrot.slane %v1807, %v1872
  %v1874 = vlaneseq
  %v1875 = vshrl.u32 %v1874, 7
  %v1876 = vsub.s32 2, %v1875
  %v1877 = vrot.slane %v1808, %v1876
  %v1878 = vlaneseq
  %v1879 = vshrl.u32 %v1878, 7
  %v1880 = vsub.s32 2, %v1879
  %v1881 = vrot.slane %v1809, %v1880
  %v1882 = vlaneseq
  %v1883 = vshrl.u32 %v1882, 7
  %v1884 = vsub.s32 2, %v1883
  %v1885 = vrot.slane %v1810, %v1884
  %v1886 = vmul.f32 %v1868, %v1873
  %v1887 = vmul.f32 %v1868, %v1877
  %v1888 = vmul.f32 %v1868, %v1881
  %v1889 = vmul.f32 %v1868, %v1885
  %v1890 = vadd.f32 %v1862, %v1886
  %v1891 = vadd.f32 %v1863, %v1887
  %v1892 = vadd.f32 %v1864, %v1888
  %v1893 = vadd.f32 %v1865, %v1889
  %1894 = vset.pattern.permute.xlu0 3
  %1895 = vperm.xlu0 %1894, %v1812
  %v1896 = vpop.permute.xlu0 %1895
  %v1898 = vlaneseq
  %v1899 = vshrl.u32 %v1898, 7
  %v1900 = vsub.s32 3, %v1899
  %v1901 = vrot.slane %v1807, %v1900
  %v1902 = vlaneseq
  %v1903 = vshrl.u32 %v1902, 7
  %v1904 = vsub.s32 3, %v1903
  %v1905 = vrot.slane %v1808, %v1904
  %v1906 = vlaneseq
  %v1907 = vshrl.u32 %v1906, 7
  %v1908 = vsub.s32 3, %v1907
  %v1909 = vrot.slane %v1809, %v1908
  %v1910 = vlaneseq
  %v1911 = vshrl.u32 %v1910, 7
  %v1912 = vsub.s32 3, %v1911
  %v1913 = vrot.slane %v1810, %v1912
  %v1914 = vmul.f32 %v1896, %v1901
  %v1915 = vmul.f32 %v1896, %v1905
  %v1916 = vmul.f32 %v1896, %v1909
  %v1917 = vmul.f32 %v1896, %v1913
  %v1918 = vadd.f32 %v1890, %v1914
  %v1919 = vadd.f32 %v1891, %v1915
  %v1920 = vadd.f32 %v1892, %v1916
  %v1921 = vadd.f32 %v1893, %v1917
  %v1922 = vadd.f32 %v1749, %v1918
  %v1923 = vadd.f32 %v1750, %v1919
  %v1924 = vadd.f32 %v1751, %v1920
  %v1925 = vadd.f32 %v1752, %v1921
  %v1926 = vld [vmem:[%s13] sm:$0xff]
  %v1927 = vld [vmem:[%s13 + $0x8] sm:$0xff]
  %v1928 = vld [vmem:[%s13 + $0x10] sm:$0xff]
  %v1929 = vld [vmem:[%s13 + $0x18] sm:$0xff]
  %v1930 = vld [vmem:[%s13 + $0x20] sm:$0xff]
  %v1931 = vld [vmem:[%s13 + $0x28] sm:$0xff]
  %v1932 = vld [vmem:[%s13 + $0x30] sm:$0xff]
  %v1933 = vld [vmem:[%s13 + $0x38] sm:$0xff]
  %v1934 = vld [vmem:[%s13 + $0x40] sm:$0xff]
  %v1935 = vld [vmem:[%s13 + $0x48] sm:$0xff]
  %v1936 = vld [vmem:[%s13 + $0x50] sm:$0xff]
  %v1937 = vld [vmem:[%s13 + $0x58] sm:$0xff]
  %v1938 = vld [vmem:[%s13 + $0x60] sm:$0xff]
  %v1939 = vld [vmem:[%s13 + $0x68] sm:$0xff]
  %v1940 = vld [vmem:[%s13 + $0x70] sm:$0xff]
  %v1941 = vld [vmem:[%s13 + $0x78] sm:$0xff]
  %v1942 = vld [vmem:[%s13 + $0x80] sm:$0xff]
  %v1943 = vld [vmem:[%s13 + $0x88] sm:$0xff]
  %v1944 = vld [vmem:[%s13 + $0x90] sm:$0xff]
  %v1945 = vld [vmem:[%s13 + $0x98] sm:$0xff]
  %v1946 = vld [vmem:[%s13 + $0xa0] sm:$0xff]
  %v1947 = vld [vmem:[%s13 + $0xa8] sm:$0xff]
  %v1948 = vld [vmem:[%s13 + $0xb0] sm:$0xff]
  %v1949 = vld [vmem:[%s13 + $0xb8] sm:$0xff]
  %v1950 = vld [vmem:[%s13 + $0xc0] sm:$0xff]
  %v1951 = vld [vmem:[%s13 + $0xc8] sm:$0xff]
  %v1952 = vld [vmem:[%s13 + $0xd0] sm:$0xff]
  %v1953 = vld [vmem:[%s13 + $0xd8] sm:$0xff]
  %v1954 = vld [vmem:[%s13 + $0xe0] sm:$0xff]
  %v1955 = vld [vmem:[%s13 + $0xe8] sm:$0xff]
  %v1956 = vld [vmem:[%s13 + $0xf0] sm:$0xff]
  %v1957 = vld [vmem:[%s13 + $0xf8] sm:$0xff]
  %v1958 = vld [vmem:[%s13 + $0x100] sm:$0xff]
  %v1959 = vld [vmem:[%s13 + $0x108] sm:$0xff]
  %v1960 = vld [vmem:[%s13 + $0x110] sm:$0xff]
  %v1961 = vld [vmem:[%s13 + $0x118] sm:$0xff]
  %v1962 = vld [vmem:[%s13 + $0x120] sm:$0xff]
  %v1963 = vld [vmem:[%s13 + $0x128] sm:$0xff]
  %v1964 = vld [vmem:[%s13 + $0x130] sm:$0xff]
  %v1965 = vld [vmem:[%s13 + $0x138] sm:$0xff]
  %v1966 = vld [vmem:[%s13 + $0x140] sm:$0xff]
  %v1967 = vld [vmem:[%s13 + $0x148] sm:$0xff]
  %v1968 = vld [vmem:[%s13 + $0x150] sm:$0xff]
  %v1969 = vld [vmem:[%s13 + $0x158] sm:$0xff]
  %v1970 = vld [vmem:[%s13 + $0x160] sm:$0xff]
  %v1971 = vld [vmem:[%s13 + $0x168] sm:$0xff]
  %v1972 = vld [vmem:[%s13 + $0x170] sm:$0xff]
  %v1973 = vld [vmem:[%s13 + $0x178] sm:$0xff]
  %v1974 = vld [vmem:[%s13 + $0x180] sm:$0xff]
  %v1975 = vld [vmem:[%s13 + $0x188] sm:$0xff]
  %v1976 = vld [vmem:[%s13 + $0x190] sm:$0xff]
  %v1977 = vld [vmem:[%s13 + $0x198] sm:$0xff]
  %v1978 = vld [vmem:[%s13 + $0x1a0] sm:$0xff]
  %v1979 = vld [vmem:[%s13 + $0x1a8] sm:$0xff]
  %v1980 = vld [vmem:[%s13 + $0x1b0] sm:$0xff]
  %v1981 = vld [vmem:[%s13 + $0x1b8] sm:$0xff]
  %v1982 = vld [vmem:[%s13 + $0x1c0] sm:$0xff]
  %v1983 = vld [vmem:[%s13 + $0x1c8] sm:$0xff]
  %v1984 = vld [vmem:[%s13 + $0x1d0] sm:$0xff]
  %v1985 = vld [vmem:[%s13 + $0x1d8] sm:$0xff]
  %v1986 = vld [vmem:[%s13 + $0x1e0] sm:$0xff]
  %v1987 = vld [vmem:[%s13 + $0x1e8] sm:$0xff]
  %v1988 = vld [vmem:[%s13 + $0x1f0] sm:$0xff]
  %v1989 = vld [vmem:[%s13 + $0x1f8] sm:$0xff]
  %1990 = vmatprep.subr.mxu0 0.0
  %1991 = vmatpush1.msra.mxu0 %v1926
  %1992 = vmatprep.subr.mxu0 0.0
  %1993 = vmatpush1.msra.mxu0 %v1927
  %1994 = vmatprep.subr.mxu0 0.0
  %1995 = vmatpush1.msra.mxu0 %v1928
  %1996 = vmatprep.subr.mxu0 0.0
  %1997 = vmatpush1.msra.mxu0 %v1929
  %1998 = vmatprep.subr.mxu0 0.0
  %1999 = vmatpush1.msra.mxu0 %v1930
  %2000 = vmatprep.subr.mxu0 0.0
  %2001 = vmatpush1.msra.mxu0 %v1931
  %2002 = vmatprep.subr.mxu0 0.0
  %2003 = vmatpush1.msra.mxu0 %v1932
  %2004 = vmatprep.subr.mxu0 0.0
  %2005 = vmatpush1.msra.mxu0 %v1933
  %2006 = vmatprep.subr.mxu0 0.0
  %2007 = vmatpush1.msra.mxu0 %v1934
  %2008 = vmatprep.subr.mxu0 0.0
  %2009 = vmatpush1.msra.mxu0 %v1935
  %2010 = vmatprep.subr.mxu0 0.0
  %2011 = vmatpush1.msra.mxu0 %v1936
  %2012 = vmatprep.subr.mxu0 0.0
  %2013 = vmatpush1.msra.mxu0 %v1937
  %2014 = vmatprep.subr.mxu0 0.0
  %2015 = vmatpush1.msra.mxu0 %v1938
  %2016 = vmatprep.subr.mxu0 0.0
  %2017 = vmatpush1.msra.mxu0 %v1939
  %2018 = vmatprep.subr.mxu0 0.0
  %2019 = vmatpush1.msra.mxu0 %v1940
  %2020 = vmatprep.subr.mxu0 0.0
  %2021 = vmatpush1.msra.mxu0 %v1941
  %2022 = vmatprep.subr.mxu0 0.0
  %2023 = vmatpush1.msra.mxu0 %v1942
  %2024 = vmatprep.subr.mxu0 0.0
  %2025 = vmatpush1.msra.mxu0 %v1943
  %2026 = vmatprep.subr.mxu0 0.0
  %2027 = vmatpush1.msra.mxu0 %v1944
  %2028 = vmatprep.subr.mxu0 0.0
  %2029 = vmatpush1.msra.mxu0 %v1945
  %2030 = vmatprep.subr.mxu0 0.0
  %2031 = vmatpush1.msra.mxu0 %v1946
  %2032 = vmatprep.subr.mxu0 0.0
  %2033 = vmatpush1.msra.mxu0 %v1947
  %2034 = vmatprep.subr.mxu0 0.0
  %2035 = vmatpush1.msra.mxu0 %v1948
  %2036 = vmatprep.subr.mxu0 0.0
  %2037 = vmatpush1.msra.mxu0 %v1949
  %2038 = vmatprep.subr.mxu0 0.0
  %2039 = vmatpush1.msra.mxu0 %v1950
  %2040 = vmatprep.subr.mxu0 0.0
  %2041 = vmatpush1.msra.mxu0 %v1951
  %2042 = vmatprep.subr.mxu0 0.0
  %2043 = vmatpush1.msra.mxu0 %v1952
  %2044 = vmatprep.subr.mxu0 0.0
  %2045 = vmatpush1.msra.mxu0 %v1953
  %2046 = vmatprep.subr.mxu0 0.0
  %2047 = vmatpush1.msra.mxu0 %v1954
  %2048 = vmatprep.subr.mxu0 0.0
  %2049 = vmatpush1.msra.mxu0 %v1955
  %2050 = vmatprep.subr.mxu0 0.0
  %2051 = vmatpush1.msra.mxu0 %v1956
  %2052 = vmatprep.subr.mxu0 0.0
  %2053 = vmatpush1.msra.mxu0 %v1957
  %2054 = vmatprep.mubr.f32.mxu0 %v1923
  %2055 = vmatmul.mubr.f32.gmra.mrb[0].mxu0 %v1922
  %v2056 = vpop.f32.mrb[0].mxu0
  %v2057 = vadd.f32 0.0, %v2056
  %v2058 = vpop.f32.mrb[0].mxu0
  %2059 = vdwg.mxu0
  %2060 = vmatprep.subr.mxu0 0.0
  %2061 = vmatpush1.msra.mxu0 %v1958
  %2062 = vmatprep.subr.mxu0 0.0
  %2063 = vmatpush1.msra.mxu0 %v1959
  %2064 = vmatprep.subr.mxu0 0.0
  %2065 = vmatpush1.msra.mxu0 %v1960
  %2066 = vmatprep.subr.mxu0 0.0
  %2067 = vmatpush1.msra.mxu0 %v1961
  %2068 = vmatprep.subr.mxu0 0.0
  %2069 = vmatpush1.msra.mxu0 %v1962
  %2070 = vmatprep.subr.mxu0 0.0
  %2071 = vmatpush1.msra.mxu0 %v1963
  %2072 = vmatprep.subr.mxu0 0.0
  %2073 = vmatpush1.msra.mxu0 %v1964
  %2074 = vmatprep.subr.mxu0 0.0
  %2075 = vmatpush1.msra.mxu0 %v1965
  %2076 = vmatprep.subr.mxu0 0.0
  %2077 = vmatpush1.msra.mxu0 %v1966
  %2078 = vmatprep.subr.mxu0 0.0
  %2079 = vmatpush1.msra.mxu0 %v1967
  %2080 = vmatprep.subr.mxu0 0.0
  %2081 = vmatpush1.msra.mxu0 %v1968
  %2082 = vmatprep.subr.mxu0 0.0
  %2083 = vmatpush1.msra.mxu0 %v1969
  %2084 = vmatprep.subr.mxu0 0.0
  %2085 = vmatpush1.msra.mxu0 %v1970
  %2086 = vmatprep.subr.mxu0 0.0
  %2087 = vmatpush1.msra.mxu0 %v1971
  %2088 = vmatprep.subr.mxu0 0.0
  %2089 = vmatpush1.msra.mxu0 %v1972
  %2090 = vmatprep.subr.mxu0 0.0
  %2091 = vmatpush1.msra.mxu0 %v1973
  %2092 = vmatprep.subr.mxu0 0.0
  %2093 = vmatpush1.msra.mxu0 %v1974
  %2094 = vmatprep.subr.mxu0 0.0
  %2095 = vmatpush1.msra.mxu0 %v1975
  %2096 = vmatprep.subr.mxu0 0.0
  %2097 = vmatpush1.msra.mxu0 %v1976
  %2098 = vmatprep.subr.mxu0 0.0
  %2099 = vmatpush1.msra.mxu0 %v1977
  %2100 = vmatprep.subr.mxu0 0.0
  %2101 = vmatpush1.msra.mxu0 %v1978
  %2102 = vmatprep.subr.mxu0 0.0
  %2103 = vmatpush1.msra.mxu0 %v1979
  %2104 = vmatprep.subr.mxu0 0.0
  %2105 = vmatpush1.msra.mxu0 %v1980
  %2106 = vmatprep.subr.mxu0 0.0
  %2107 = vmatpush1.msra.mxu0 %v1981
  %2108 = vmatprep.subr.mxu0 0.0
  %2109 = vmatpush1.msra.mxu0 %v1982
  %2110 = vmatprep.subr.mxu0 0.0
  %2111 = vmatpush1.msra.mxu0 %v1983
  %2112 = vmatprep.subr.mxu0 0.0
  %2113 = vmatpush1.msra.mxu0 %v1984
  %2114 = vmatprep.subr.mxu0 0.0
  %2115 = vmatpush1.msra.mxu0 %v1985
  %2116 = vmatprep.subr.mxu0 0.0
  %2117 = vmatpush1.msra.mxu0 %v1986
  %2118 = vmatprep.subr.mxu0 0.0
  %2119 = vmatpush1.msra.mxu0 %v1987
  %2120 = vmatprep.subr.mxu0 0.0
  %2121 = vmatpush1.msra.mxu0 %v1988
  %2122 = vmatprep.subr.mxu0 0.0
  %2123 = vmatpush1.msra.mxu0 %v1989
  %2124 = vmatprep.mubr.f32.mxu0 %v1925
  %2125 = vmatmul.mubr.f32.gmra.mrb[0].mxu0 %v1924
  %v2126 = vpop.f32.mrb[0].mxu0
  %v2127 = vadd.f32 %v2057, %v2126
  %v2128 = vpop.f32.mrb[0].mxu0
  %2129 = vdwg.mxu0
  %2130 = vmatprep.subr.mxu0 0.0
  %2131 = vmatpush1.msra.mxu0 %v1926
  %2132 = vmatprep.subr.mxu0 0.0
  %2133 = vmatpush1.msra.mxu0 %v1927
  %2134 = vmatprep.subr.mxu0 0.0
  %2135 = vmatpush1.msra.mxu0 %v1928
  %2136 = vmatprep.subr.mxu0 0.0
  %2137 = vmatpush1.msra.mxu0 %v1929
  %2138 = vmatprep.subr.mxu0 0.0
  %2139 = vmatpush1.msra.mxu0 %v1930
  %2140 = vmatprep.subr.mxu0 0.0
  %2141 = vmatpush1.msra.mxu0 %v1931
  %2142 = vmatprep.subr.mxu0 0.0
  %2143 = vmatpush1.msra.mxu0 %v1932
  %2144 = vmatprep.subr.mxu0 0.0
  %2145 = vmatpush1.msra.mxu0 %v1933
  %2146 = vmatprep.subr.mxu0 0.0
  %2147 = vmatpush1.msra.mxu0 %v1934
  %2148 = vmatprep.subr.mxu0 0.0
  %2149 = vmatpush1.msra.mxu0 %v1935
  %2150 = vmatprep.subr.mxu0 0.0
  %2151 = vmatpush1.msra.mxu0 %v1936
  %2152 = vmatprep.subr.mxu0 0.0
  %2153 = vmatpush1.msra.mxu0 %v1937
  %2154 = vmatprep.subr.mxu0 0.0
  %2155 = vmatpush1.msra.mxu0 %v1938
  %2156 = vmatprep.subr.mxu0 0.0
  %2157 = vmatpush1.msra.mxu0 %v1939
  %2158 = vmatprep.subr.mxu0 0.0
  %2159 = vmatpush1.msra.mxu0 %v1940
  %2160 = vmatprep.subr.mxu0 0.0
  %2161 = vmatpush1.msra.mxu0 %v1941
  %2162 = vmatprep.subr.mxu0 0.0
  %2163 = vmatpush1.msra.mxu0 %v1942
  %2164 = vmatprep.subr.mxu0 0.0
  %2165 = vmatpush1.msra.mxu0 %v1943
  %2166 = vmatprep.subr.mxu0 0.0
  %2167 = vmatpush1.msra.mxu0 %v1944
  %2168 = vmatprep.subr.mxu0 0.0
  %2169 = vmatpush1.msra.mxu0 %v1945
  %2170 = vmatprep.subr.mxu0 0.0
  %2171 = vmatpush1.msra.mxu0 %v1946
  %2172 = vmatprep.subr.mxu0 0.0
  %2173 = vmatpush1.msra.mxu0 %v1947
  %2174 = vmatprep.subr.mxu0 0.0
  %2175 = vmatpush1.msra.mxu0 %v1948
  %2176 = vmatprep.subr.mxu0 0.0
  %2177 = vmatpush1.msra.mxu0 %v1949
  %2178 = vmatprep.subr.mxu0 0.0
  %2179 = vmatpush1.msra.mxu0 %v1950
  %2180 = vmatprep.subr.mxu0 0.0
  %2181 = vmatpush1.msra.mxu0 %v1951
  %2182 = vmatprep.subr.mxu0 0.0
  %2183 = vmatpush1.msra.mxu0 %v1952
  %2184 = vmatprep.subr.mxu0 0.0
  %2185 = vmatpush1.msra.mxu0 %v1953
  %2186 = vmatprep.subr.mxu0 0.0
  %2187 = vmatpush1.msra.mxu0 %v1954
  %2188 = vmatprep.subr.mxu0 0.0
  %2189 = vmatpush1.msra.mxu0 %v1955
  %2190 = vmatprep.subr.mxu0 0.0
  %2191 = vmatpush1.msra.mxu0 %v1956
  %2192 = vmatprep.subr.mxu0 0.0
  %2193 = vmatpush1.msra.mxu0 %v1957
  %2194 = vmatprep.mubr.f32.mxu0 %v56
  %2195 = vmatmul.mubr.f32.gmra.mrb[0].mxu0 %v50
  %v2196 = vpop.f32.mrb[0].mxu0
  %v2197 = vadd.f32 0.0, %v2196
  %v2198 = vpop.f32.mrb[0].mxu0
  %2199 = vdwg.mxu0
  %2200 = vmatprep.subr.mxu0 0.0
  %2201 = vmatpush1.msra.mxu0 %v1958
  %2202 = vmatprep.subr.mxu0 0.0
  %2203 = vmatpush1.msra.mxu0 %v1959
  %2204 = vmatprep.subr.mxu0 0.0
  %2205 = vmatpush1.msra.mxu0 %v1960
  %2206 = vmatprep.subr.mxu0 0.0
  %2207 = vmatpush1.msra.mxu0 %v1961
  %2208 = vmatprep.subr.mxu0 0.0
  %2209 = vmatpush1.msra.mxu0 %v1962
  %2210 = vmatprep.subr.mxu0 0.0
  %2211 = vmatpush1.msra.mxu0 %v1963
  %2212 = vmatprep.subr.mxu0 0.0
  %2213 = vmatpush1.msra.mxu0 %v1964
  %2214 = vmatprep.subr.mxu0 0.0
  %2215 = vmatpush1.msra.mxu0 %v1965
  %2216 = vmatprep.subr.mxu0 0.0
  %2217 = vmatpush1.msra.mxu0 %v1966
  %2218 = vmatprep.subr.mxu0 0.0
  %2219 = vmatpush1.msra.mxu0 %v1967
  %2220 = vmatprep.subr.mxu0 0.0
  %2221 = vmatpush1.msra.mxu0 %v1968
  %2222 = vmatprep.subr.mxu0 0.0
  %2223 = vmatpush1.msra.mxu0 %v1969
  %2224 = vmatprep.subr.mxu0 0.0
  %2225 = vmatpush1.msra.mxu0 %v1970
  %2226 = vmatprep.subr.mxu0 0.0
  %2227 = vmatpush1.msra.mxu0 %v1971
  %2228 = vmatprep.subr.mxu0 0.0
  %2229 = vmatpush1.msra.mxu0 %v1972
  %2230 = vmatprep.subr.mxu0 0.0
  %2231 = vmatpush1.msra.mxu0 %v1973
  %2232 = vmatprep.subr.mxu0 0.0
  %2233 = vmatpush1.msra.mxu0 %v1974
  %2234 = vmatprep.subr.mxu0 0.0
  %2235 = vmatpush1.msra.mxu0 %v1975
  %2236 = vmatprep.subr.mxu0 0.0
  %2237 = vmatpush1.msra.mxu0 %v1976
  %2238 = vmatprep.subr.mxu0 0.0
  %2239 = vmatpush1.msra.mxu0 %v1977
  %2240 = vmatprep.subr.mxu0 0.0
  %2241 = vmatpush1.msra.mxu0 %v1978
  %2242 = vmatprep.subr.mxu0 0.0
  %2243 = vmatpush1.msra.mxu0 %v1979
  %2244 = vmatprep.subr.mxu0 0.0
  %2245 = vmatpush1.msra.mxu0 %v1980
  %2246 = vmatprep.subr.mxu0 0.0
  %2247 = vmatpush1.msra.mxu0 %v1981
  %2248 = vmatprep.subr.mxu0 0.0
  %2249 = vmatpush1.msra.mxu0 %v1982
  %2250 = vmatprep.subr.mxu0 0.0
  %2251 = vmatpush1.msra.mxu0 %v1983
  %2252 = vmatprep.subr.mxu0 0.0
  %2253 = vmatpush1.msra.mxu0 %v1984
  %2254 = vmatprep.subr.mxu0 0.0
  %2255 = vmatpush1.msra.mxu0 %v1985
  %2256 = vmatprep.subr.mxu0 0.0
  %2257 = vmatpush1.msra.mxu0 %v1986
  %2258 = vmatprep.subr.mxu0 0.0
  %2259 = vmatpush1.msra.mxu0 %v1987
  %2260 = vmatprep.subr.mxu0 0.0
  %2261 = vmatpush1.msra.mxu0 %v1988
  %2262 = vmatprep.subr.mxu0 0.0
  %2263 = vmatpush1.msra.mxu0 %v1989
  %2264 = vmatprep.mubr.f32.mxu0 %v57
  %2265 = vmatmul.mubr.f32.gmra.mrb[0].mxu0 %v51
  %v2266 = vpop.f32.mrb[0].mxu0
  %v2267 = vadd.f32 %v2197, %v2266
  %v2268 = vpop.f32.mrb[0].mxu0
  %2269 = vdwg.mxu0
  %v2270 = vld [vmem:[%s7] sm:$0xf]
  %v2271 = vld [vmem:[%s8] sm:$0xf]
  %v2272 = vsel %vm60, %v2127, 0.0
  %2273 = vadd.xlane.f32.xlu0 %v2272
  %v2274 = vpop.xlane.xlu0 %2273
  %v2275 = vrcp.pop 128.0
  %v2276 = vmul.f32 %v2274, %v2275
  %v2277 = vsub.f32 %v2127, %v2276
  %v2278 = vmul.f32 %v2277, %v2277
  %v2279 = vsel %vm60, %v2278, 0.0
  %2280 = vadd.xlane.f32.xlu0 %v2279
  %v2281 = vpop.xlane.xlu0 %2280
  %v2282 = vmul.f32 %v2281, %v2275
  %v2283 = vadd.f32 %v2282, 1e-05
  %v2284 = vrsqrt.pop %v2283
  %v2285 = vmul.f32 %v2277, %v2284
  %2287 = vset.pattern.permute.xlu0 0
  %2288 = vperm.xlu0 %2287, %v2270
  %v2289 = vpop.permute.xlu0 %2288
  %v2291 = vmul.f32 %v2285, %v2289
  %2293 = vset.pattern.permute.xlu0 0
  %2294 = vperm.xlu0 %2293, %v2271
  %v2295 = vpop.permute.xlu0 %2294
  %v2297 = vadd.f32 %v2291, %v2295
  %v2298 = vmax.f32 %v2297, 0.0
  %v2299 = vld [vmem:[%s9] sm:$0xff]
  %v2300 = vld [vmem:[%s9 + $0x8] sm:$0xff]
  %2302 = vset.pattern.permute.xlu0 0
  %2303 = vperm.xlu0 %2302, %v2299
  %v2304 = vpop.permute.xlu0 %2303
  %2307 = vset.pattern.permute.xlu0 0
  %2308 = vperm.xlu0 %2307, %v2300
  %v2309 = vpop.permute.xlu0 %2308
  %v2311 = vlaneseq
  %v2312 = vshrl.u32 %v2311, 7
  %v2313 = vsub.s32 0, %v2312
  %v2314 = vrot.slane %v2298, %v2313
  %v2315 = vmul.f32 %v2304, %v2314
  %v2316 = vmul.f32 %v2309, %v2314
  %2317 = vset.pattern.permute.xlu0 1
  %2318 = vperm.xlu0 %2317, %v2299
  %v2319 = vpop.permute.xlu0 %2318
  %2321 = vset.pattern.permute.xlu0 1
  %2322 = vperm.xlu0 %2321, %v2300
  %v2323 = vpop.permute.xlu0 %2322
  %v2325 = vlaneseq
  %v2326 = vshrl.u32 %v2325, 7
  %v2327 = vsub.s32 1, %v2326
  %v2328 = vrot.slane %v2298, %v2327
  %v2329 = vmul.f32 %v2319, %v2328
  %v2330 = vmul.f32 %v2323, %v2328
  %v2331 = vadd.f32 %v2315, %v2329
  %v2332 = vadd.f32 %v2316, %v2330
  %2333 = vset.pattern.permute.xlu0 2
  %2334 = vperm.xlu0 %2333, %v2299
  %v2335 = vpop.permute.xlu0 %2334
  %2337 = vset.pattern.permute.xlu0 2
  %2338 = vperm.xlu0 %2337, %v2300
  %v2339 = vpop.permute.xlu0 %2338
  %v2341 = vlaneseq
  %v2342 = vshrl.u32 %v2341, 7
  %v2343 = vsub.s32 2, %v2342
  %v2344 = vrot.slane %v2298, %v2343
  %v2345 = vmul.f32 %v2335, %v2344
  %v2346 = vmul.f32 %v2339, %v2344
  %v2347 = vadd.f32 %v2331, %v2345
  %v2348 = vadd.f32 %v2332, %v2346
  %2349 = vset.pattern.permute.xlu0 3
  %2350 = vperm.xlu0 %2349, %v2299
  %v2351 = vpop.permute.xlu0 %2350
  %2353 = vset.pattern.permute.xlu0 3
  %2354 = vperm.xlu0 %2353, %v2300
  %v2355 = vpop.permute.xlu0 %2354
  %v2357 = vlaneseq
  %v2358 = vshrl.u32 %v2357, 7
  %v2359 = vsub.s32 3, %v2358
  %v2360 = vrot.slane %v2298, %v2359
  %v2361 = vmul.f32 %v2351, %v2360
  %v2362 = vmul.f32 %v2355, %v2360
  %v2363 = vadd.f32 %v2347, %v2361
  %v2364 = vadd.f32 %v2348, %v2362
  %v2365 = vld [vmem:[%s10] sm:$0xff]
  %v2366 = vld [vmem:[%s10 + $0x8] sm:$0xff]
  %v2367 = vld [vmem:[%s11] sm:$0xff]
  %v2368 = vld [vmem:[%s11 + $0x8] sm:$0xff]
  %2369 = vadd.xlane.f32.xlu0 %v2363
  %v2370 = vpop.xlane.xlu0 %2369
  %2371 = vadd.xlane.f32.xlu0 %v2364
  %v2372 = vpop.xlane.xlu0 %2371
  %v2373 = vmul.f32 %v2370, %v2275
  %v2374 = vmul.f32 %v2372, %v2275
  %v2375 = vsub.f32 %v2363, %v2373
  %v2376 = vsub.f32 %v2364, %v2374
  %v2377 = vmul.f32 %v2375, %v2375
  %v2378 = vmul.f32 %v2376, %v2376
  %2379 = vadd.xlane.f32.xlu0 %v2377
  %v2380 = vpop.xlane.xlu0 %2379
  %2381 = vadd.xlane.f32.xlu0 %v2378
  %v2382 = vpop.xlane.xlu0 %2381
  %v2383 = vmul.f32 %v2380, %v2275
  %v2384 = vmul.f32 %v2382, %v2275
  %v2385 = vadd.f32 %v2383, 1e-05
  %v2386 = vadd.f32 %v2384, 1e-05
  %v2387 = vrsqrt.pop %v2385
  %v2388 = vrsqrt.pop %v2386
  %v2389 = vmul.f32 %v2375, %v2387
  %v2390 = vmul.f32 %v2376, %v2388
  %2392 = vset.pattern.permute.xlu0 0
  %2393 = vperm.xlu0 %2392, %v2365
  %v2394 = vpop.permute.xlu0 %2393
  %2397 = vset.pattern.permute.xlu0 0
  %2398 = vperm.xlu0 %2397, %v2366
  %v2399 = vpop.permute.xlu0 %2398
  %v2401 = vmul.f32 %v2389, %v2394
  %v2402 = vmul.f32 %v2390, %v2399
  %2404 = vset.pattern.permute.xlu0 0
  %2405 = vperm.xlu0 %2404, %v2367
  %v2406 = vpop.permute.xlu0 %2405
  %2409 = vset.pattern.permute.xlu0 0
  %2410 = vperm.xlu0 %2409, %v2368
  %v2411 = vpop.permute.xlu0 %2410
  %v2413 = vadd.f32 %v2401, %v2406
  %v2414 = vadd.f32 %v2402, %v2411
  %v2415 = vld [vmem:[%s12] sm:$0xff]
  %v2416 = vld [vmem:[%s12 + $0x8] sm:$0xff]
  %2418 = vset.pattern.permute.xlu0 0
  %2419 = vperm.xlu0 %2418, %v2415
  %v2420 = vpop.permute.xlu0 %2419
  %2423 = vset.pattern.permute.xlu0 0
  %2424 = vperm.xlu0 %2423, %v2416
  %v2425 = vpop.permute.xlu0 %2424
  %v2427 = vlaneseq
  %v2428 = vshrl.u32 %v2427, 7
  %v2429 = vsub.s32 0, %v2428
  %v2430 = vrot.slane %v2267, %v2429
  %v2431 = vmul.f32 %v2420, %v2430
  %v2432 = vmul.f32 %v2425, %v2430
  %2433 = vset.pattern.permute.xlu0 1
  %2434 = vperm.xlu0 %2433, %v2415
  %v2435 = vpop.permute.xlu0 %2434
  %2437 = vset.pattern.permute.xlu0 1
  %2438 = vperm.xlu0 %2437, %v2416
  %v2439 = vpop.permute.xlu0 %2438
  %v2441 = vlaneseq
  %v2442 = vshrl.u32 %v2441, 7
  %v2443 = vsub.s32 1, %v2442
  %v2444 = vrot.slane %v2267, %v2443
  %v2445 = vmul.f32 %v2435, %v2444
  %v2446 = vmul.f32 %v2439, %v2444
  %v2447 = vadd.f32 %v2431, %v2445
  %v2448 = vadd.f32 %v2432, %v2446
  %2449 = vset.pattern.permute.xlu0 2
  %2450 = vperm.xlu0 %2449, %v2415
  %v2451 = vpop.permute.xlu0 %2450
  %2453 = vset.pattern.permute.xlu0 2
  %2454 = vperm.xlu0 %2453, %v2416
  %v2455 = vpop.permute.xlu0 %2454
  %v2457 = vlaneseq
  %v2458 = vshrl.u32 %v2457, 7
  %v2459 = vsub.s32 2, %v2458
  %v2460 = vrot.slane %v2267, %v2459
  %v2461 = vmul.f32 %v2451, %v2460
  %v2462 = vmul.f32 %v2455, %v2460
  %v2463 = vadd.f32 %v2447, %v2461
  %v2464 = vadd.f32 %v2448, %v2462
  %2465 = vset.pattern.permute.xlu0 3
  %2466 = vperm.xlu0 %2465, %v2415
  %v2467 = vpop.permute.xlu0 %2466
  %2469 = vset.pattern.permute.xlu0 3
  %2470 = vperm.xlu0 %2469, %v2416
  %v2471 = vpop.permute.xlu0 %2470
  %v2473 = vlaneseq
  %v2474 = vshrl.u32 %v2473, 7
  %v2475 = vsub.s32 3, %v2474
  %v2476 = vrot.slane %v2267, %v2475
  %v2477 = vmul.f32 %v2467, %v2476
  %v2478 = vmul.f32 %v2471, %v2476
  %v2479 = vadd.f32 %v2463, %v2477
  %v2480 = vadd.f32 %v2464, %v2478
  %v2481 = vadd.f32 %v2413, %v2479
  %v2482 = vadd.f32 %v2414, %v2480
  %2483 = vst [vmem:[%s15] sm:$0xff] %v2481
  %2484 = vst [vmem:[%s15 + $0x8] sm:$0xff] %v2482
  // Predicated region
  $region62: #{bottleneck_block_forward.1} parent=0 // pred_check
    _
  $region63: #{bottleneck_block_forward.1} parent=0 // pred_check_branch
    %2486 = sbr.rel (0) target = $region65
  $region64: #{bottleneck_block_forward.1} parent=0 // pred_region
    _
  $region65: #{bottleneck_block_forward.1} parent=0 // pred_fallthru
    _
  // Predicated region
  $region66: #{bottleneck_block_forward.1} parent=0 // pred_check
    _
  $region67: #{bottleneck_block_forward.1} parent=0 // pred_check_branch
    %2488 = sbr.rel (0) target = $region69
  $region68: #{bottleneck_block_forward.1} parent=0 // pred_region
    _
  $region69: #{bottleneck_block_forward.1} parent=0 // pred_fallthru
    _

</llo_original>
